<compile_context>
chip_gen: v6e
topology: v6e:2x2x1
jax: 0.10.0
libtpu: 0.0.40
codegen_flags: <defaults>
</compile_context>

<pallas_src>
import functools

import jax
import jax.numpy as jnp
from jax.experimental import pallas as pl
from jax.experimental.pallas import tpu as pltpu


# ---------------------------------------------------------------------------
# Kernel
# ---------------------------------------------------------------------------
def _maxpool1d_2(y):
    """MaxPool1d(kernel=2, stride=2) over axis 1 of (B, L, C), floor semantics."""
    B, L, C = y.shape
    Lp = (L // 2) * 2
    if Lp != L:                      # PyTorch floor-divides odd lengths
        y = y[:, :Lp, :]
    return jnp.max(y.reshape(B, Lp // 2, 2, C), axis=2)


def fused_kernel(p1_ref, w1_ref, b1_ref, w2_ref, b2_ref,
                 wih_ref, whh_ref, bl_ref, wfc_ref, bfc_ref,
                 o_ref, pad2_ref, *, batch, seq_len):
    B, L0 = batch, seq_len
    c1 = w1_ref.shape[1]             # 64
    k2, _, c2 = w2_ref.shape         # 3, 64, 128
    H = whh_ref.shape[0]             # lstm hidden (=128)

    # ---- conv1: single im2col matmul + bias + ReLU + MaxPool1d(2) ----------
    acc = jnp.dot(p1_ref[...], w1_ref[...],
                  preferred_element_type=jnp.float32) + b1_ref[...]   # (B*L0, 64)
    y = _maxpool1d_2(jnp.maximum(acc, 0.0).reshape(B, L0, c1))        # (B, L1, 64)
    L1 = y.shape[1]

    # ---- conv2: per-tap MXU accumulation on a padded VMEM copy -------------
    # Only the 2*p2 boundary rows are zeroed (no full-scratch memset).
    p2 = (k2 - 1) // 2
    if p2 > 0:
        pad2_ref[:, :p2, :] = jnp.zeros((B, p2, c1), jnp.float32)
        pad2_ref[:, p2 + L1:, :] = jnp.zeros((B, p2, c1), jnp.float32)
    pad2_ref[:, p2:p2 + L1, :] = y
    acc = jnp.zeros((B, L1, c2), jnp.float32) + b2_ref[...]
    for k in range(k2):              # static unroll over the taps
        acc = acc + jnp.einsum("blc,cd->bld", pad2_ref[:, k:k + L1, :],
                               w2_ref[k], preferred_element_type=jnp.float32)
    y = _maxpool1d_2(jnp.maximum(acc, 0.0))                           # (B, T, 128)
    T = y.shape[1]

    # ---- LSTM: input projection hoisted out of the recurrence --------------
    gx = jnp.dot(y.reshape(B * T, c2), wih_ref[...],
                 preferred_element_type=jnp.float32) + bl_ref[...]    # (B*T, 4H)
    gx = gx.reshape(B, T, 4 * H)

    h = jnp.zeros((B, H), jnp.float32)
    c = jnp.zeros((B, H), jnp.float32)
    for t in range(T):               # T is small & static -> unrolled
        gates = gx[:, t, :] + jnp.dot(h, whh_ref[...],
                                      preferred_element_type=jnp.float32)
        i = jax.nn.sigmoid(gates[:, 0 * H:1 * H])
        f = jax.nn.sigmoid(gates[:, 1 * H:2 * H])
        g = jnp.tanh(gates[:, 2 * H:3 * H])
        o = jax.nn.sigmoid(gates[:, 3 * H:4 * H])
        c = f * c + i * g
        h = o * jnp.tanh(c)

    # ---- FC on the last hidden state ----------------------------------------
    out = jnp.dot(h, wfc_ref[...], preferred_element_type=jnp.float32) \
        + bfc_ref[...]
    o_ref[...] = out.astype(o_ref.dtype)


# ---------------------------------------------------------------------------
# Wrapper
# ---------------------------------------------------------------------------
_VMEM = pl.BlockSpec(memory_space=pltpu.MemorySpace.VMEM)


def cnn1d_lstm_forward(x_nchw, params):
    """x_nchw: (B, 3, H, W) float32 -> logits (B, num_classes)."""
    B, C, _, W = x_nchw.shape
    w1, b1, w2, b2, wih, whh, bl, wfc, bfc = params
    c1 = w1.shape[1]
    k1 = w1.shape[0] // C
    k2 = w2.shape[0]
    ncls = wfc.shape[1]
    p1 = (k1 - 1) // 2
    L1 = W // 2

    # H-mean, channels-last transpose, 'same' pre-pad and conv1 im2col patches
    # are tiny, lane-sparse (C=3) ops -> do them once in XLA so the kernel's
    # first op is a dense (B*W, k1*C) x (k1*C, 64) MXU matmul.
    xs = jnp.transpose(jnp.mean(x_nchw, axis=2), (0, 2, 1))          # (B, W, 3)
    xp = jnp.pad(xs, ((0, 0), (p1, p1), (0, 0)))                     # (B, W+k1-1, 3)
    patches = jnp.concatenate([xp[:, k:k + W, :] for k in range(k1)],
                              axis=-1)                               # (B, W, k1*C)
    patches = patches.reshape(B * W, k1 * C)

    kernel = functools.partial(fused_kernel, batch=B, seq_len=W)
    return pl.pallas_call(
        kernel,
        out_shape=jax.ShapeDtypeStruct((B, ncls), jnp.float32),
        in_specs=[_VMEM] * 10,
        out_specs=_VMEM,
        scratch_shapes=[pltpu.VMEM((B, L1 + k2 - 1, c1), jnp.float32)],
    )(patches, w1, b1, w2, b2, wih, whh, bl, wfc, bfc)


def init_params(key, *, in_channels=3, conv1_out=64, conv2_out=128,
                k1=5, k2=3, lstm_hidden=128, num_classes=3):
    ks = jax.random.split(key, 9)
    s = 0.05
    # conv1 weight already in im2col layout (K1*Cin, C1); a real PyTorch
    # weight maps via torch_w1.permute(2, 1, 0).reshape(K1*Cin, C1).
    w1 = s * jax.random.normal(ks[0], (k1 * in_channels, conv1_out), jnp.float32)
    b1 = s * jax.random.normal(ks[1], (1, conv1_out), jnp.float32)
    # conv2 weight per-tap (K2, C1, C2) = torch_w2.permute(2, 1, 0).
    w2 = s * jax.random.normal(ks[2], (k2, conv1_out, conv2_out), jnp.float32)
    b2 = s * jax.random.normal(ks[3], (1, conv2_out), jnp.float32)
    wih = s * jax.random.normal(ks[4], (conv2_out, 4 * lstm_hidden), jnp.float32)
    whh = s * jax.random.normal(ks[5], (lstm_hidden, 4 * lstm_hidden), jnp.float32)
    # combined b_ih + b_hh of the PyTorch LSTM (mathematically equivalent)
    bl = s * jax.random.normal(ks[6], (1, 4 * lstm_hidden), jnp.float32)
    wfc = s * jax.random.normal(ks[7], (lstm_hidden, num_classes), jnp.float32)
    bfc = s * jax.random.normal(ks[8], (1, num_classes), jnp.float32)
    return (w1, b1, w2, b2, wih, whh, bl, wfc, bfc)


if __name__ == "__main__":
    key = jax.random.PRNGKey(0)
    kx, kp = jax.random.split(key)

    # NCHW input consistent with the module: (B=2, C=3, H=16, W=16)
    x = jax.random.normal(kx, (2, 3, 16, 16), jnp.float32)
    params = init_params(kp, lstm_hidden=128, num_classes=3)

    fwd = jax.jit(cnn1d_lstm_forward)
    out = jax.block_until_ready(fwd(x, params))

    assert out.shape == (2, 3), out.shape
    assert bool(jnp.all(jnp.isfinite(out)))
    print("KERNEL_OK")
</pallas_src>

<mosaic_0001>
module attributes {stable_mosaic.version = 11 : i64} {
  func.func @fused_kernel(%arg0: memref<32x15xf32, #tpu.memory_space<vmem>>, %arg1: memref<15x64xf32, #tpu.memory_space<vmem>>, %arg2: memref<1x64xf32, #tpu.memory_space<vmem>>, %arg3: memref<3x64x128xf32, #tpu.memory_space<vmem>>, %arg4: memref<1x128xf32, #tpu.memory_space<vmem>>, %arg5: memref<128x512xf32, #tpu.memory_space<vmem>>, %arg6: memref<128x512xf32, #tpu.memory_space<vmem>>, %arg7: memref<1x512xf32, #tpu.memory_space<vmem>>, %arg8: memref<128x3xf32, #tpu.memory_space<vmem>>, %arg9: memref<1x3xf32, #tpu.memory_space<vmem>>, %arg10: memref<2x3xf32, #tpu.memory_space<vmem>>, %arg11: memref<2x10x64xf32, #tpu.memory_space<vmem>>) attributes {dimension_semantics = [], scalar_prefetch = 0 : i64, scratch_operands = 1 : i64, tpu.core_type = #tpu.core_type<tc>} {
    %c0 = arith.constant 0 : index
    %c0_0 = arith.constant 0 : index
    %0 = vector.load %arg0[%c0, %c0_0] : memref<32x15xf32, #tpu.memory_space<vmem>>, vector<32x15xf32>
    %c0_1 = arith.constant 0 : index
    %c0_2 = arith.constant 0 : index
    %1 = vector.load %arg1[%c0_1, %c0_2] : memref<15x64xf32, #tpu.memory_space<vmem>>, vector<15x64xf32>
    %cst = arith.constant dense<0.000000e+00> : vector<32x64xf32>
    %2 = tpu.matmul %0, %1, %cst {dimension_numbers = #tpu.dot_dimension_numbers<[1], [0], [0], [1], [0, 0, 1, 1], [], []>} : vector<32x15xf32>, vector<15x64xf32>, vector<32x64xf32> -> vector<32x64xf32>
    %c0_3 = arith.constant 0 : index
    %c0_4 = arith.constant 0 : index
    %3 = vector.load %arg2[%c0_3, %c0_4] : memref<1x64xf32, #tpu.memory_space<vmem>>, vector<1x64xf32>
    %4 = vector.broadcast %3 : vector<1x64xf32> to vector<32x64xf32>
    %5 = arith.addf %2, %4 : vector<32x64xf32>
    %cst_5 = arith.constant 0.000000e+00 : f32
    %6 = vector.broadcast %cst_5 : f32 to vector<32x64xf32>
    %7 = arith.maximumf %5, %6 : vector<32x64xf32>
    %8 = vector.shape_cast %7 : vector<32x64xf32> to vector<2x16x64xf32>
    %9 = vector.shape_cast %8 : vector<2x16x64xf32> to vector<2x8x2x64xf32>
    %cst_6 = arith.constant dense<0xFF800000> : vector<2x8x64xf32>
    %10 = vector.multi_reduction <maximumf>, %9, %cst_6 [2] : vector<2x8x2x64xf32> to vector<2x8x64xf32>
    %cst_7 = arith.constant 0.000000e+00 : f32
    %11 = vector.broadcast %cst_7 : f32 to vector<2x1x64xf32>
    %c0_8 = arith.constant 0 : index
    %c0_9 = arith.constant 0 : index
    %c0_10 = arith.constant 0 : index
    %12 = vector.load %arg11[%c0_8, %c0_9, %c0_10] : memref<2x10x64xf32, #tpu.memory_space<vmem>>, vector<2x1x64xf32>
    tpu.vector_store %arg11[%c0_8, %c0_9, %c0_10], %11 {strides = array<i32>} : memref<2x10x64xf32, #tpu.memory_space<vmem>>, vector<2x1x64xf32>,
    %cst_11 = arith.constant 0.000000e+00 : f32
    %13 = vector.broadcast %cst_11 : f32 to vector<2x1x64xf32>
    %c0_12 = arith.constant 0 : index
    %c9 = arith.constant 9 : index
    %c0_13 = arith.constant 0 : index
    %14 = vector.load %arg11[%c0_12, %c9, %c0_13] : memref<2x10x64xf32, #tpu.memory_space<vmem>>, vector<2x1x64xf32>
    tpu.vector_store %arg11[%c0_12, %c9, %c0_13], %13 {strides = array<i32>} : memref<2x10x64xf32, #tpu.memory_space<vmem>>, vector<2x1x64xf32>,
    %c0_14 = arith.constant 0 : index
    %c1 = arith.constant 1 : index
    %c0_15 = arith.constant 0 : index
    %15 = vector.load %arg11[%c0_14, %c1, %c0_15] : memref<2x10x64xf32, #tpu.memory_space<vmem>>, vector<2x8x64xf32>
    tpu.vector_store %arg11[%c0_14, %c1, %c0_15], %10 {strides = array<i32>} : memref<2x10x64xf32, #tpu.memory_space<vmem>>, vector<2x8x64xf32>,
    %cst_16 = arith.constant 0.000000e+00 : f32
    %16 = vector.broadcast %cst_16 : f32 to vector<2x8x128xf32>
    %c0_17 = arith.constant 0 : index
    %c0_18 = arith.constant 0 : index
    %17 = vector.load %arg4[%c0_17, %c0_18] : memref<1x128xf32, #tpu.memory_space<vmem>>, vector<1x128xf32>
    %18 = vector.shape_cast %17 : vector<1x128xf32> to vector<1x1x128xf32>
    %19 = vector.broadcast %18 : vector<1x1x128xf32> to vector<2x8x128xf32>
    %20 = arith.addf %16, %19 : vector<2x8x128xf32>
    %c0_19 = arith.constant 0 : index
    %c0_20 = arith.constant 0 : index
    %c0_21 = arith.constant 0 : index
    %21 = vector.load %arg11[%c0_19, %c0_20, %c0_21] : memref<2x10x64xf32, #tpu.memory_space<vmem>>, vector<2x8x64xf32>
    %c0_22 = arith.constant 0 : index
    %c0_23 = arith.constant 0 : index
    %c0_24 = arith.constant 0 : index
    %22 = vector.load %arg3[%c0_22, %c0_23, %c0_24] : memref<3x64x128xf32, #tpu.memory_space<vmem>>, vector<1x64x128xf32>
    %23 = vector.shape_cast %22 : vector<1x64x128xf32> to vector<64x128xf32>
    "tpu.trace_start"() <{level = 10 : i32, message = "blc,cd->bld"}> : () -> ()
    %cst_25 = arith.constant dense<0.000000e+00> : vector<2x8x128xf32>
    %24 = tpu.matmul %21, %23, %cst_25 {dimension_numbers = #tpu.dot_dimension_numbers<[2], [0], [0, 1], [1], [0, 0, 0, 1, 1, 1], [], []>} : vector<2x8x64xf32>, vector<64x128xf32>, vector<2x8x128xf32> -> vector<2x8x128xf32>
    "tpu.trace_stop"() : () -> ()
    %25 = arith.addf %20, %24 : vector<2x8x128xf32>
    %c0_26 = arith.constant 0 : index
    %c1_27 = arith.constant 1 : index
    %c0_28 = arith.constant 0 : index
    %26 = vector.load %arg11[%c0_26, %c1_27, %c0_28] : memref<2x10x64xf32, #tpu.memory_space<vmem>>, vector<2x8x64xf32>
    %c1_29 = arith.constant 1 : index
    %c0_30 = arith.constant 0 : index
    %c0_31 = arith.constant 0 : index
    %27 = vector.load %arg3[%c1_29, %c0_30, %c0_31] : memref<3x64x128xf32, #tpu.memory_space<vmem>>, vector<1x64x128xf32>
    %28 = vector.shape_cast %27 : vector<1x64x128xf32> to vector<64x128xf32>
    "tpu.trace_start"() <{level = 10 : i32, message = "blc,cd->bld"}> : () -> ()
    %cst_32 = arith.constant dense<0.000000e+00> : vector<2x8x128xf32>
    %29 = tpu.matmul %26, %28, %cst_32 {dimension_numbers = #tpu.dot_dimension_numbers<[2], [0], [0, 1], [1], [0, 0, 0, 1, 1, 1], [], []>} : vector<2x8x64xf32>, vector<64x128xf32>, vector<2x8x128xf32> -> vector<2x8x128xf32>
    "tpu.trace_stop"() : () -> ()
    %30 = arith.addf %25, %29 : vector<2x8x128xf32>
    %c0_33 = arith.constant 0 : index
    %c2 = arith.constant 2 : index
    %c0_34 = arith.constant 0 : index
    %31 = vector.load %arg11[%c0_33, %c2, %c0_34] : memref<2x10x64xf32, #tpu.memory_space<vmem>>, vector<2x8x64xf32>
    %c2_35 = arith.constant 2 : index
    %c0_36 = arith.constant 0 : index
    %c0_37 = arith.constant 0 : index
    %32 = vector.load %arg3[%c2_35, %c0_36, %c0_37] : memref<3x64x128xf32, #tpu.memory_space<vmem>>, vector<1x64x128xf32>
    %33 = vector.shape_cast %32 : vector<1x64x128xf32> to vector<64x128xf32>
    "tpu.trace_start"() <{level = 10 : i32, message = "blc,cd->bld"}> : () -> ()
    %cst_38 = arith.constant dense<0.000000e+00> : vector<2x8x128xf32>
    %34 = tpu.matmul %31, %33, %cst_38 {dimension_numbers = #tpu.dot_dimension_numbers<[2], [0], [0, 1], [1], [0, 0, 0, 1, 1, 1], [], []>} : vector<2x8x64xf32>, vector<64x128xf32>, vector<2x8x128xf32> -> vector<2x8x128xf32>
    "tpu.trace_stop"() : () -> ()
    %35 = arith.addf %30, %34 : vector<2x8x128xf32>
    %cst_39 = arith.constant 0.000000e+00 : f32
    %36 = vector.broadcast %cst_39 : f32 to vector<2x8x128xf32>
    %37 = arith.maximumf %35, %36 : vector<2x8x128xf32>
    %38 = vector.shape_cast %37 : vector<2x8x128xf32> to vector<2x4x2x128xf32>
    %cst_40 = arith.constant dense<0xFF800000> : vector<2x4x128xf32>
    %39 = vector.multi_reduction <maximumf>, %38, %cst_40 [2] : vector<2x4x2x128xf32> to vector<2x4x128xf32>
    %40 = vector.shape_cast %39 : vector<2x4x128xf32> to vector<8x128xf32>
    %c0_41 = arith.constant 0 : index
    %c0_42 = arith.constant 0 : index
    %41 = vector.load %arg5[%c0_41, %c0_42] : memref<128x512xf32, #tpu.memory_space<vmem>>, vector<128x512xf32>
    %cst_43 = arith.constant dense<0.000000e+00> : vector<8x512xf32>
    %42 = tpu.matmul %40, %41, %cst_43 {dimension_numbers = #tpu.dot_dimension_numbers<[1], [0], [0], [1], [0, 0, 1, 1], [], []>} : vector<8x128xf32>, vector<128x512xf32>, vector<8x512xf32> -> vector<8x512xf32>
    %c0_44 = arith.constant 0 : index
    %c0_45 = arith.constant 0 : index
    %43 = vector.load %arg7[%c0_44, %c0_45] : memref<1x512xf32, #tpu.memory_space<vmem>>, vector<1x512xf32>
    %44 = vector.broadcast %43 : vector<1x512xf32> to vector<8x512xf32>
    %45 = arith.addf %42, %44 : vector<8x512xf32>
    %46 = vector.shape_cast %45 : vector<8x512xf32> to vector<2x4x512xf32>
    %cst_46 = arith.constant 0.000000e+00 : f32
    %47 = vector.broadcast %cst_46 : f32 to vector<2x128xf32>
    %cst_47 = arith.constant 0.000000e+00 : f32
    %48 = vector.broadcast %cst_47 : f32 to vector<2x128xf32>
    %49 = vector.extract_strided_slice %46 {offsets = [0, 0, 0], sizes = [2, 1, 512], strides = [1, 1, 1]} : vector<2x4x512xf32> to vector<2x1x512xf32>
    %50 = vector.shape_cast %49 : vector<2x1x512xf32> to vector<2x512xf32>
    %c0_48 = arith.constant 0 : index
    %c0_49 = arith.constant 0 : index
    %51 = vector.load %arg6[%c0_48, %c0_49] : memref<128x512xf32, #tpu.memory_space<vmem>>, vector<128x512xf32>
    %cst_50 = arith.constant dense<0.000000e+00> : vector<2x512xf32>
    %52 = tpu.matmul %47, %51, %cst_50 {dimension_numbers = #tpu.dot_dimension_numbers<[1], [0], [0], [1], [0, 0, 1, 1], [], []>} : vector<2x128xf32>, vector<128x512xf32>, vector<2x512xf32> -> vector<2x512xf32>
    %53 = arith.addf %50, %52 : vector<2x512xf32>
    %54 = vector.extract_strided_slice %53 {offsets = [0, 0], sizes = [2, 128], strides = [1, 1]} : vector<2x512xf32> to vector<2x128xf32>
    %55 = arith.negf %54 : vector<2x128xf32>
    %56 = math.exp %55 : vector<2x128xf32>
    %cst_51 = arith.constant 1.000000e+00 : f32
    %57 = vector.broadcast %cst_51 : f32 to vector<2x128xf32>
    %58 = arith.addf %57, %56 : vector<2x128xf32>
    %59 = arith.divf %57, %58 : vector<2x128xf32>
    %60 = vector.extract_strided_slice %53 {offsets = [0, 128], sizes = [2, 128], strides = [1, 1]} : vector<2x512xf32> to vector<2x128xf32>
    %61 = arith.negf %60 : vector<2x128xf32>
    %62 = math.exp %61 : vector<2x128xf32>
    %cst_52 = arith.constant 1.000000e+00 : f32
    %63 = vector.broadcast %cst_52 : f32 to vector<2x128xf32>
    %64 = arith.addf %63, %62 : vector<2x128xf32>
    %65 = arith.divf %63, %64 : vector<2x128xf32>
    %66 = vector.extract_strided_slice %53 {offsets = [0, 256], sizes = [2, 128], strides = [1, 1]} : vector<2x512xf32> to vector<2x128xf32>
    %67 = math.tanh %66 : vector<2x128xf32>
    %68 = vector.extract_strided_slice %53 {offsets = [0, 384], sizes = [2, 128], strides = [1, 1]} : vector<2x512xf32> to vector<2x128xf32>
    %69 = arith.negf %68 : vector<2x128xf32>
    %70 = math.exp %69 : vector<2x128xf32>
    %cst_53 = arith.constant 1.000000e+00 : f32
    %71 = vector.broadcast %cst_53 : f32 to vector<2x128xf32>
    %72 = arith.addf %71, %70 : vector<2x128xf32>
    %73 = arith.divf %71, %72 : vector<2x128xf32>
    %74 = arith.mulf %65, %48 : vector<2x128xf32>
    %75 = arith.mulf %59, %67 : vector<2x128xf32>
    %76 = arith.addf %74, %75 : vector<2x128xf32>
    %77 = math.tanh %76 : vector<2x128xf32>
    %78 = arith.mulf %73, %77 : vector<2x128xf32>
    %79 = vector.extract_strided_slice %46 {offsets = [0, 1, 0], sizes = [2, 1, 512], strides = [1, 1, 1]} : vector<2x4x512xf32> to vector<2x1x512xf32>
    %80 = vector.shape_cast %79 : vector<2x1x512xf32> to vector<2x512xf32>
    %c0_54 = arith.constant 0 : index
    %c0_55 = arith.constant 0 : index
    %81 = vector.load %arg6[%c0_54, %c0_55] : memref<128x512xf32, #tpu.memory_space<vmem>>, vector<128x512xf32>
    %cst_56 = arith.constant dense<0.000000e+00> : vector<2x512xf32>
    %82 = tpu.matmul %78, %81, %cst_56 {dimension_numbers = #tpu.dot_dimension_numbers<[1], [0], [0], [1], [0, 0, 1, 1], [], []>} : vector<2x128xf32>, vector<128x512xf32>, vector<2x512xf32> -> vector<2x512xf32>
    %83 = arith.addf %80, %82 : vector<2x512xf32>
    %84 = vector.extract_strided_slice %83 {offsets = [0, 0], sizes = [2, 128], strides = [1, 1]} : vector<2x512xf32> to vector<2x128xf32>
    %85 = arith.negf %84 : vector<2x128xf32>
    %86 = math.exp %85 : vector<2x128xf32>
    %cst_57 = arith.constant 1.000000e+00 : f32
    %87 = vector.broadcast %cst_57 : f32 to vector<2x128xf32>
    %88 = arith.addf %87, %86 : vector<2x128xf32>
    %89 = arith.divf %87, %88 : vector<2x128xf32>
    %90 = vector.extract_strided_slice %83 {offsets = [0, 128], sizes = [2, 128], strides = [1, 1]} : vector<2x512xf32> to vector<2x128xf32>
    %91 = arith.negf %90 : vector<2x128xf32>
    %92 = math.exp %91 : vector<2x128xf32>
    %cst_58 = arith.constant 1.000000e+00 : f32
    %93 = vector.broadcast %cst_58 : f32 to vector<2x128xf32>
    %94 = arith.addf %93, %92 : vector<2x128xf32>
    %95 = arith.divf %93, %94 : vector<2x128xf32>
    %96 = vector.extract_strided_slice %83 {offsets = [0, 256], sizes = [2, 128], strides = [1, 1]} : vector<2x512xf32> to vector<2x128xf32>
    %97 = math.tanh %96 : vector<2x128xf32>
    %98 = vector.extract_strided_slice %83 {offsets = [0, 384], sizes = [2, 128], strides = [1, 1]} : vector<2x512xf32> to vector<2x128xf32>
    %99 = arith.negf %98 : vector<2x128xf32>
    %100 = math.exp %99 : vector<2x128xf32>
    %cst_59 = arith.constant 1.000000e+00 : f32
    %101 = vector.broadcast %cst_59 : f32 to vector<2x128xf32>
    %102 = arith.addf %101, %100 : vector<2x128xf32>
    %103 = arith.divf %101, %102 : vector<2x128xf32>
    %104 = arith.mulf %95, %76 : vector<2x128xf32>
    %105 = arith.mulf %89, %97 : vector<2x128xf32>
    %106 = arith.addf %104, %105 : vector<2x128xf32>
    %107 = math.tanh %106 : vector<2x128xf32>
    %108 = arith.mulf %103, %107 : vector<2x128xf32>
    %109 = vector.extract_strided_slice %46 {offsets = [0, 2, 0], sizes = [2, 1, 512], strides = [1, 1, 1]} : vector<2x4x512xf32> to vector<2x1x512xf32>
    %110 = vector.shape_cast %109 : vector<2x1x512xf32> to vector<2x512xf32>
    %c0_60 = arith.constant 0 : index
    %c0_61 = arith.constant 0 : index
    %111 = vector.load %arg6[%c0_60, %c0_61] : memref<128x512xf32, #tpu.memory_space<vmem>>, vector<128x512xf32>
    %cst_62 = arith.constant dense<0.000000e+00> : vector<2x512xf32>
    %112 = tpu.matmul %108, %111, %cst_62 {dimension_numbers = #tpu.dot_dimension_numbers<[1], [0], [0], [1], [0, 0, 1, 1], [], []>} : vector<2x128xf32>, vector<128x512xf32>, vector<2x512xf32> -> vector<2x512xf32>
    %113 = arith.addf %110, %112 : vector<2x512xf32>
    %114 = vector.extract_strided_slice %113 {offsets = [0, 0], sizes = [2, 128], strides = [1, 1]} : vector<2x512xf32> to vector<2x128xf32>
    %115 = arith.negf %114 : vector<2x128xf32>
    %116 = math.exp %115 : vector<2x128xf32>
    %cst_63 = arith.constant 1.000000e+00 : f32
    %117 = vector.broadcast %cst_63 : f32 to vector<2x128xf32>
    %118 = arith.addf %117, %116 : vector<2x128xf32>
    %119 = arith.divf %117, %118 : vector<2x128xf32>
    %120 = vector.extract_strided_slice %113 {offsets = [0, 128], sizes = [2, 128], strides = [1, 1]} : vector<2x512xf32> to vector<2x128xf32>
    %121 = arith.negf %120 : vector<2x128xf32>
    %122 = math.exp %121 : vector<2x128xf32>
    %cst_64 = arith.constant 1.000000e+00 : f32
    %123 = vector.broadcast %cst_64 : f32 to vector<2x128xf32>
    %124 = arith.addf %123, %122 : vector<2x128xf32>
    %125 = arith.divf %123, %124 : vector<2x128xf32>
    %126 = vector.extract_strided_slice %113 {offsets = [0, 256], sizes = [2, 128], strides = [1, 1]} : vector<2x512xf32> to vector<2x128xf32>
    %127 = math.tanh %126 : vector<2x128xf32>
    %128 = vector.extract_strided_slice %113 {offsets = [0, 384], sizes = [2, 128], strides = [1, 1]} : vector<2x512xf32> to vector<2x128xf32>
    %129 = arith.negf %128 : vector<2x128xf32>
    %130 = math.exp %129 : vector<2x128xf32>
    %cst_65 = arith.constant 1.000000e+00 : f32
    %131 = vector.broadcast %cst_65 : f32 to vector<2x128xf32>
    %132 = arith.addf %131, %130 : vector<2x128xf32>
    %133 = arith.divf %131, %132 : vector<2x128xf32>
    %134 = arith.mulf %125, %106 : vector<2x128xf32>
    %135 = arith.mulf %119, %127 : vector<2x128xf32>
    %136 = arith.addf %134, %135 : vector<2x128xf32>
    %137 = math.tanh %136 : vector<2x128xf32>
    %138 = arith.mulf %133, %137 : vector<2x128xf32>
    %139 = vector.extract_strided_slice %46 {offsets = [0, 3, 0], sizes = [2, 1, 512], strides = [1, 1, 1]} : vector<2x4x512xf32> to vector<2x1x512xf32>
    %140 = vector.shape_cast %139 : vector<2x1x512xf32> to vector<2x512xf32>
    %c0_66 = arith.constant 0 : index
    %c0_67 = arith.constant 0 : index
    %141 = vector.load %arg6[%c0_66, %c0_67] : memref<128x512xf32, #tpu.memory_space<vmem>>, vector<128x512xf32>
    %cst_68 = arith.constant dense<0.000000e+00> : vector<2x512xf32>
    %142 = tpu.matmul %138, %141, %cst_68 {dimension_numbers = #tpu.dot_dimension_numbers<[1], [0], [0], [1], [0, 0, 1, 1], [], []>} : vector<2x128xf32>, vector<128x512xf32>, vector<2x512xf32> -> vector<2x512xf32>
    %143 = arith.addf %140, %142 : vector<2x512xf32>
    %144 = vector.extract_strided_slice %143 {offsets = [0, 0], sizes = [2, 128], strides = [1, 1]} : vector<2x512xf32> to vector<2x128xf32>
    %145 = arith.negf %144 : vector<2x128xf32>
    %146 = math.exp %145 : vector<2x128xf32>
    %cst_69 = arith.constant 1.000000e+00 : f32
    %147 = vector.broadcast %cst_69 : f32 to vector<2x128xf32>
    %148 = arith.addf %147, %146 : vector<2x128xf32>
    %149 = arith.divf %147, %148 : vector<2x128xf32>
    %150 = vector.extract_strided_slice %143 {offsets = [0, 128], sizes = [2, 128], strides = [1, 1]} : vector<2x512xf32> to vector<2x128xf32>
    %151 = arith.negf %150 : vector<2x128xf32>
    %152 = math.exp %151 : vector<2x128xf32>
    %cst_70 = arith.constant 1.000000e+00 : f32
    %153 = vector.broadcast %cst_70 : f32 to vector<2x128xf32>
    %154 = arith.addf %153, %152 : vector<2x128xf32>
    %155 = arith.divf %153, %154 : vector<2x128xf32>
    %156 = vector.extract_strided_slice %143 {offsets = [0, 256], sizes = [2, 128], strides = [1, 1]} : vector<2x512xf32> to vector<2x128xf32>
    %157 = math.tanh %156 : vector<2x128xf32>
    %158 = vector.extract_strided_slice %143 {offsets = [0, 384], sizes = [2, 128], strides = [1, 1]} : vector<2x512xf32> to vector<2x128xf32>
    %159 = arith.negf %158 : vector<2x128xf32>
    %160 = math.exp %159 : vector<2x128xf32>
    %cst_71 = arith.constant 1.000000e+00 : f32
    %161 = vector.broadcast %cst_71 : f32 to vector<2x128xf32>
    %162 = arith.addf %161, %160 : vector<2x128xf32>
    %163 = arith.divf %161, %162 : vector<2x128xf32>
    %164 = arith.mulf %155, %136 : vector<2x128xf32>
    %165 = arith.mulf %149, %157 : vector<2x128xf32>
    %166 = arith.addf %164, %165 : vector<2x128xf32>
    %167 = math.tanh %166 : vector<2x128xf32>
    %168 = arith.mulf %163, %167 : vector<2x128xf32>
    %c0_72 = arith.constant 0 : index
    %c0_73 = arith.constant 0 : index
    %169 = vector.load %arg8[%c0_72, %c0_73] : memref<128x3xf32, #tpu.memory_space<vmem>>, vector<128x3xf32>
    %cst_74 = arith.constant dense<0.000000e+00> : vector<2x3xf32>
    %170 = tpu.matmul %168, %169, %cst_74 {dimension_numbers = #tpu.dot_dimension_numbers<[1], [0], [0], [1], [0, 0, 1, 1], [], []>} : vector<2x128xf32>, vector<128x3xf32>, vector<2x3xf32> -> vector<2x3xf32>
    %c0_75 = arith.constant 0 : index
    %c0_76 = arith.constant 0 : index
    %171 = vector.load %arg9[%c0_75, %c0_76] : memref<1x3xf32, #tpu.memory_space<vmem>>, vector<1x3xf32>
    %172 = vector.broadcast %171 : vector<1x3xf32> to vector<2x3xf32>
    %173 = arith.addf %170, %172 : vector<2x3xf32>
    %c0_77 = arith.constant 0 : index
    %c0_78 = arith.constant 0 : index
    %174 = vector.load %arg10[%c0_77, %c0_78] : memref<2x3xf32, #tpu.memory_space<vmem>>, vector<2x3xf32>
    tpu.vector_store %arg10[%c0_77, %c0_78], %173 {strides = array<i32>} : memref<2x3xf32, #tpu.memory_space<vmem>>, vector<2x3xf32>,
    return
  }
}

</mosaic_0001>

<llo_original>
// kernel: cnn1d_lstm_forward.1
$region0: #{cnn1d_lstm_forward.1}
  #allocation0 [shape = 'u32[]', space=smem, size = 0x4, offset = 0x4, fixed_abs, tag = 'smem constant byte address 0x4 - core index']
  #allocation1 [shape = 'u32[144,128]{1,0:T(1,128)}', space=vmem, size = 0x12000, scoped, tag = 'internal scratch']
  #allocation2 [shape = 'f32[2,10,64]{2,1,0:T(8,128)}', space=vmem, size = 0x4000, scoped, tag = 'scratch operand']
  %s0 = inlined_call_operand.vmem [shape: f32[32,15], index: 0, kind: input, shape index: {}]
  %s1 = inlined_call_operand.vmem [shape: f32[15,64], index: 1, kind: input, shape index: {}]
  %s2 = inlined_call_operand.vmem [shape: f32[1,64], index: 2, kind: input, shape index: {}]
  %s3 = inlined_call_operand.vmem [shape: f32[3,64,128], index: 3, kind: input, shape index: {}]
  %s4 = inlined_call_operand.vmem [shape: f32[1,128], index: 4, kind: input, shape index: {}]
  %s5 = inlined_call_operand.hbm [shape: f32[128,512], index: 5, kind: input, shape index: {}]
  %s6 = inlined_call_operand.hbm [shape: f32[128,512], index: 6, kind: input, shape index: {}]
  %s7 = inlined_call_operand.vmem [shape: f32[1,512], index: 7, kind: input, shape index: {}]
  %s8 = inlined_call_operand.vmem [shape: f32[128,3], index: 8, kind: input, shape index: {}]
  %s9 = inlined_call_operand.vmem [shape: f32[1,3], index: 9, kind: input, shape index: {}]
  %s10 = inlined_call_operand.hbm [shape: f32[2,3], index: 10, kind: output, shape index: {}]
  %s11 = sld [smem:[#allocation0]]
  $region58: #{cnn1d_lstm_forward.1} parent=0
    _
  %s13 = ssub.s32 1, %s11
  %s14 = scalar_select 0, %s13, %s11
  $region1: #{cnn1d_lstm_forward.1} parent=0
    #allocation3 [shape = 'u8[262144]{0}', space=vmem, size = 0x40000, scoped, tag = 'input window, operand 5, single buffered']
    #allocation4 [shape = 's32[1]{0}', space=sflag, size = 0x4, scoped, tag = 'scoped memory for cnn1d_lstm_forward.1']
    #allocation5 [shape = 's32[1]{0}', space=sflag, size = 0x4, scoped, tag = 'scoped memory for cnn1d_lstm_forward.1']
    #allocation6 [shape = 'u8[262144]{0}', space=vmem, size = 0x40000, scoped, tag = 'input window, operand 6, single buffered']
    #allocation7 [shape = 's32[1]{0}', space=sflag, size = 0x4, scoped, tag = 'scoped memory for cnn1d_lstm_forward.1']
    #allocation8 [shape = 'u8[1024]{0}', space=vmem, size = 0x400, scoped, tag = 'output window, operand 0, single buffered']
    %15 = vsyncpa [#allocation4], 0
    %16 = vsyncpa [#allocation7], 0
    %17 = vsyncpa [#allocation5], 0
    // Predicated region
    $region2: #{cnn1d_lstm_forward.1} parent=1 // pred_check
      _
    $region3: #{cnn1d_lstm_forward.1} parent=1 // pred_check_branch
      %19 = sbr.rel (0) target = $region5
    $region4: #{cnn1d_lstm_forward.1} parent=1 // pred_region
      _
    $region5: #{cnn1d_lstm_forward.1} parent=1 // pred_fallthru
      _
    // Predicated region
    $region6: #{cnn1d_lstm_forward.1} parent=1 // pred_check
      _
    $region7: #{cnn1d_lstm_forward.1} parent=1 // pred_check_branch
      %21 = sbr.rel (0) target = $region9
    $region8: #{cnn1d_lstm_forward.1} parent=1 // pred_region
      _
    $region9: #{cnn1d_lstm_forward.1} parent=1 // pred_fallthru
      _
    // Predicated region
    $region10: #{cnn1d_lstm_forward.1} parent=1 // pred_check
      _
    $region11: #{cnn1d_lstm_forward.1} parent=1 // pred_check_branch
      %23 = sbr.rel (0) target = $region13
    $region12: #{cnn1d_lstm_forward.1} parent=1 // pred_region
      _
    $region13: #{cnn1d_lstm_forward.1} parent=1 // pred_fallthru
      _
    // Predicated region
    $region14: #{cnn1d_lstm_forward.1} parent=1 // pred_check
      _
    $region15: #{cnn1d_lstm_forward.1} parent=1 // pred_check_branch
      %25 = sbr.rel (0) target = $region17
    $region16: #{cnn1d_lstm_forward.1} parent=1 // pred_region
      _
    $region17: #{cnn1d_lstm_forward.1} parent=1 // pred_fallthru
      _
    // Predicated region
    $region18: #{cnn1d_lstm_forward.1} parent=1 // pred_check
      _
    $region19: #{cnn1d_lstm_forward.1} parent=1 // pred_check_branch
      %27 = sbr.rel (0) target = $region21
    $region20: #{cnn1d_lstm_forward.1} parent=1 // pred_region
      _
    $region21: #{cnn1d_lstm_forward.1} parent=1 // pred_fallthru
      _
    // Predicated region
    $region22: #{cnn1d_lstm_forward.1} parent=1 // pred_check
      _
    $region23: #{cnn1d_lstm_forward.1} parent=1 // pred_check_branch
      %29 = sbr.rel (0) target = $region25
    $region24: #{cnn1d_lstm_forward.1} parent=1 // pred_region
      %s31 = ssub.s32 8192, 8192
      %32 = vsyncadd [#allocation4], %s31
      %s33 = sshll.u32 [#allocation3], 4
      %s34 = int_to_ptr.vmem [resolvable:$true] %s33
      %39 = dma.hbm_to_vmem [thread:$0]  %s5, 8192, %s34, [#allocation4], 512, 512, 32
    $region25: #{cnn1d_lstm_forward.1} parent=1 // pred_fallthru
      _
    // Predicated region
    $region26: #{cnn1d_lstm_forward.1} parent=1 // pred_check
      _
    $region27: #{cnn1d_lstm_forward.1} parent=1 // pred_check_branch
      %41 = sbr.rel (0) target = $region29
    $region28: #{cnn1d_lstm_forward.1} parent=1 // pred_region
      %s43 = ssub.s32 8192, 8192
      %44 = vsyncadd [#allocation7], %s43
      %s45 = sshll.u32 [#allocation6], 4
      %s46 = int_to_ptr.vmem [resolvable:$true] %s45
      %51 = dma.hbm_to_vmem [thread:$0]  %s6, 8192, %s46, [#allocation7], 512, 512, 32
    $region29: #{cnn1d_lstm_forward.1} parent=1 // pred_fallthru
      _
    // Predicated region
    $region30: #{cnn1d_lstm_forward.1} parent=1 // pred_check
      _
    $region31: #{cnn1d_lstm_forward.1} parent=1 // pred_check_branch
      %53 = sbr.rel (0) target = $region33
    $region32: #{cnn1d_lstm_forward.1} parent=1 // pred_region
      _
    $region33: #{cnn1d_lstm_forward.1} parent=1 // pred_fallthru
      _
    // Predicated region
    $region34: #{cnn1d_lstm_forward.1} parent=1 // pred_check
      _
    $region35: #{cnn1d_lstm_forward.1} parent=1 // pred_check_branch
      %55 = sbr.rel (0) target = $region37
    $region36: #{cnn1d_lstm_forward.1} parent=1 // pred_region
      _
    $region37: #{cnn1d_lstm_forward.1} parent=1 // pred_fallthru
      _
    // Predicated region
    $region38: #{cnn1d_lstm_forward.1} parent=1 // pred_check
      _
    $region39: #{cnn1d_lstm_forward.1} parent=1 // pred_check_branch
      %57 = sbr.rel (0) target = $region41
    $region40: #{cnn1d_lstm_forward.1} parent=1 // pred_region
      _
    $region41: #{cnn1d_lstm_forward.1} parent=1 // pred_fallthru
      _
    // Predicated region
    $region42: #{cnn1d_lstm_forward.1} parent=1 // pred_check
      _
    $region43: #{cnn1d_lstm_forward.1} parent=1 // pred_check_branch
      %59 = sbr.rel (0) target = $region45
    $region44: #{cnn1d_lstm_forward.1} parent=1 // pred_region
      %60 = dma.done [#allocation4], 8192
    $region45: #{cnn1d_lstm_forward.1} parent=1 // pred_fallthru
      _
    // Predicated region
    $region46: #{cnn1d_lstm_forward.1} parent=1 // pred_check
      _
    $region47: #{cnn1d_lstm_forward.1} parent=1 // pred_check_branch
      %62 = sbr.rel (0) target = $region49
    $region48: #{cnn1d_lstm_forward.1} parent=1 // pred_region
      %63 = dma.done [#allocation7], 8192
    $region49: #{cnn1d_lstm_forward.1} parent=1 // pred_fallthru
      _
    %v64 = vld [vmem:[%s0] sm:$0xff]
    %v65 = vld [vmem:[%s0 + $0x8] sm:$0xff]
    %v66 = vld [vmem:[%s0 + $0x10] sm:$0xff]
    %v67 = vld [vmem:[%s0 + $0x18] sm:$0xff]
    %v68 = vld [vmem:[%s1] sm:$0xff]
    %v69 = vld [vmem:[%s1 + $0x8] sm:$0x7f]
    %v70 = vld [vmem:[%s2] sm:$0x1]
    %v72 = vlaneseq
    %v73 = vshrl.u32 %v72, 7
    %v74 = vsub.s32 0, %v73
    %v75 = vrot.slane %v70, %v74
    %vm77 = vcmask 121856
    %v79 = vsel %vm77, %v64, 0
    %v82 = vsel %vm77, %v65, 0
    %v85 = vsel %vm77, %v66, 0
    %v88 = vsel %vm77, %v67, 0
    %vm90 = vcmask 1046528
    %v92 = vsel %vm90, %v69, 0
    %94 = vmatprep.subr.mxu0 0.0
    %95 = vmatpush1.msra.mxu0 0.0
    %96 = vmatprep.subr.mxu0 0.0
    %97 = vmatpush1.msra.mxu0 0.0
    %98 = vmatprep.subr.mxu0 0.0
    %99 = vmatpush1.msra.mxu0 0.0
    %100 = vmatprep.subr.mxu0 0.0
    %101 = vmatpush1.msra.mxu0 0.0
    %102 = vmatprep.subr.mxu0 0.0
    %103 = vmatpush1.msra.mxu0 0.0
    %104 = vmatprep.subr.mxu0 0.0
    %105 = vmatpush1.msra.mxu0 0.0
    %106 = vmatprep.subr.mxu0 0.0
    %107 = vmatpush1.msra.mxu0 0.0
    %108 = vmatprep.subr.mxu0 0.0
    %109 = vmatpush1.msra.mxu0 0.0
    %110 = vmatprep.subr.mxu0 0.0
    %111 = vmatpush1.msra.mxu0 0.0
    %112 = vmatprep.subr.mxu0 0.0
    %113 = vmatpush1.msra.mxu0 0.0
    %114 = vmatprep.subr.mxu0 0.0
    %115 = vmatpush1.msra.mxu0 0.0
    %116 = vmatprep.subr.mxu0 0.0
    %117 = vmatpush1.msra.mxu0 0.0
    %118 = vmatprep.subr.mxu0 0.0
    %119 = vmatpush1.msra.mxu0 0.0
    %120 = vmatprep.subr.mxu0 0.0
    %121 = vmatpush1.msra.mxu0 0.0
    %122 = vmatprep.subr.mxu0 0.0
    %123 = vmatpush1.msra.mxu0 %v92
    %124 = vmatprep.subr.mxu0 0.0
    %125 = vmatpush1.msra.mxu0 %v68
    %126 = vmatprep.subr.mxu0 0.0
    %127 = vmatpush2.msra.mxu0 0.0
    %128 = vmatprep.subr.mxu0 0.0
    %129 = vmatpush2.msra.mxu0 0.0
    %130 = vmatprep.subr.mxu0 0.0
    %131 = vmatpush2.msra.mxu0 0.0
    %132 = vmatprep.subr.mxu0 0.0
    %133 = vmatpush2.msra.mxu0 0.0
    %134 = vmatprep.subr.mxu0 0.0
    %135 = vmatpush2.msra.mxu0 0.0
    %136 = vmatprep.subr.mxu0 0.0
    %137 = vmatpush2.msra.mxu0 0.0
    %138 = vmatprep.subr.mxu0 0.0
    %139 = vmatpush2.msra.mxu0 0.0
    %140 = vmatprep.subr.mxu0 0.0
    %141 = vmatpush2.msra.mxu0 0.0
    %142 = vmatprep.subr.mxu0 0.0
    %143 = vmatpush2.msra.mxu0 0.0
    %144 = vmatprep.subr.mxu0 0.0
    %145 = vmatpush2.msra.mxu0 0.0
    %146 = vmatprep.subr.mxu0 0.0
    %147 = vmatpush2.msra.mxu0 0.0
    %148 = vmatprep.subr.mxu0 0.0
    %149 = vmatpush2.msra.mxu0 0.0
    %150 = vmatprep.subr.mxu0 0.0
    %151 = vmatpush2.msra.mxu0 0.0
    %152 = vmatprep.subr.mxu0 0.0
    %153 = vmatpush2.msra.mxu0 0.0
    %154 = vmatprep.subr.mxu0 0.0
    %155 = vmatpush2.msra.mxu0 0.0
    %156 = vmatprep.subr.mxu0 0.0
    %157 = vmatpush2.msra.mxu0 0.0
    %158 = vmatprep.mubr.f32.mxu0 0.0
    %159 = vmatmul.mubr.f32.gmra.mxu0 %v79
    %v160 = vpop.f32.mrf.mxu0
    %v161 = vadd.f32 %v75, %v160
    %v162 = vpop.f32.mrf.mxu0
    %163 = vmatprep.mubr.f32.mxu0 0.0
    %164 = vmatmul.mubr.f32.gmra.mxu0 %v82
    %v165 = vpop.f32.mrf.mxu0
    %v166 = vadd.f32 %v75, %v165
    %v167 = vpop.f32.mrf.mxu0
    %168 = vmatprep.mubr.f32.mxu0 0.0
    %169 = vmatmul.mubr.f32.gmra.mxu0 %v85
    %v170 = vpop.f32.mrf.mxu0
    %v171 = vadd.f32 %v75, %v170
    %v172 = vpop.f32.mrf.mxu0
    %173 = vmatprep.mubr.f32.mxu0 0.0
    %174 = vmatmul.mubr.f32.gmra.mxu0 %v88
    %v175 = vpop.f32.mrf.mxu0
    %v176 = vadd.f32 %v75, %v175
    %v177 = vpop.f32.mrf.mxu0
    %178 = vdwg.mxu0
    %v179 = vmax.f32 %v161, 0.0
    %v180 = vmax.f32 %v166, 0.0
    %v181 = vmax.f32 %v171, 0.0
    %v182 = vmax.f32 %v176, 0.0
    %v187 = vcombine.high %v179, %v179
    %v189 = vunpack.c.l.s4 1983009808
    %v190 = vunpack.c.0.s8 %v189
    %v191 = vlaneseq
    %v192 = vshrl.u32 %v191, 7
    %v193 = vsub.s32 %v190, %v192
    %v194 = vrot.slane %v179, %v193
    %v196 = vunpack.c.l.s4 1983009808
    %v197 = vunpack.c.0.s8 %v196
    %v198 = vlaneseq
    %v199 = vshrl.u32 %v198, 7
    %v200 = vsub.s32 %v197, %v199
    %v201 = vrot.slane %v187, %v200
    %v202 = vcombine.high %v194, %v194
    %v203 = vcombine.high %v201, %v201
    %v204 = vcombine.high %v180, %v180
    %v206 = vunpack.c.l.s4 1983009808
    %v207 = vunpack.c.0.s8 %v206
    %v208 = vlaneseq
    %v209 = vshrl.u32 %v208, 7
    %v210 = vsub.s32 %v207, %v209
    %v211 = vrot.slane %v180, %v210
    %v213 = vunpack.c.l.s4 1983009808
    %v214 = vunpack.c.0.s8 %v213
    %v215 = vlaneseq
    %v216 = vshrl.u32 %v215, 7
    %v217 = vsub.s32 %v214, %v216
    %v218 = vrot.slane %v204, %v217
    %v219 = vcombine.high %v211, %v211
    %v220 = vcombine.high %v218, %v218
    %v221 = vcombine.high %v181, %v181
    %v223 = vunpack.c.l.s4 1983009808
    %v224 = vunpack.c.0.s8 %v223
    %v225 = vlaneseq
    %v226 = vshrl.u32 %v225, 7
    %v227 = vsub.s32 %v224, %v226
    %v228 = vrot.slane %v181, %v227
    %v230 = vunpack.c.l.s4 1983009808
    %v231 = vunpack.c.0.s8 %v230
    %v232 = vlaneseq
    %v233 = vshrl.u32 %v232, 7
    %v234 = vsub.s32 %v231, %v233
    %v235 = vrot.slane %v221, %v234
    %v236 = vcombine.high %v228, %v228
    %v237 = vcombine.high %v235, %v235
    %v238 = vcombine.high %v182, %v182
    %v240 = vunpack.c.l.s4 1983009808
    %v241 = vunpack.c.0.s8 %v240
    %v242 = vlaneseq
    %v243 = vshrl.u32 %v242, 7
    %v244 = vsub.s32 %v241, %v243
    %v245 = vrot.slane %v182, %v244
    %v247 = vunpack.c.l.s4 1983009808
    %v248 = vunpack.c.0.s8 %v247
    %v249 = vlaneseq
    %v250 = vshrl.u32 %v249, 7
    %v251 = vsub.s32 %v248, %v250
    %v252 = vrot.slane %v238, %v251
    %v253 = vcombine.high %v245, %v245
    %v254 = vcombine.high %v252, %v252
    %vm271 = vcmask 517120
    %v272 = vsel %vm271, %v194, -inf
    %v273 = vrot.slane %v272, 4
    %v274 = vmax.f32 %v272, %v273
    %v275 = vrot.slane %v274, 2
    %v276 = vmax.f32 %v274, %v275
    %v277 = vrot.slane %v276, 1
    %v278 = vmax.f32 %v276, %v277
    %v279 = vsel %vm271, %v202, -inf
    %v280 = vrot.slane %v279, 4
    %v281 = vmax.f32 %v279, %v280
    %v282 = vrot.slane %v281, 2
    %v283 = vmax.f32 %v281, %v282
    %v284 = vrot.slane %v283, 1
    %v285 = vmax.f32 %v283, %v284
    %v286 = vsel %vm271, %v201, -inf
    %v287 = vrot.slane %v286, 4
    %v288 = vmax.f32 %v286, %v287
    %v289 = vrot.slane %v288, 2
    %v290 = vmax.f32 %v288, %v289
    %v291 = vrot.slane %v290, 1
    %v292 = vmax.f32 %v290, %v291
    %v293 = vsel %vm271, %v203, -inf
    %v294 = vrot.slane %v293, 4
    %v295 = vmax.f32 %v293, %v294
    %v296 = vrot.slane %v295, 2
    %v297 = vmax.f32 %v295, %v296
    %v298 = vrot.slane %v297, 1
    %v299 = vmax.f32 %v297, %v298
    %v300 = vsel %vm271, %v211, -inf
    %v301 = vrot.slane %v300, 4
    %v302 = vmax.f32 %v300, %v301
    %v303 = vrot.slane %v302, 2
    %v304 = vmax.f32 %v302, %v303
    %v305 = vrot.slane %v304, 1
    %v306 = vmax.f32 %v304, %v305
    %v307 = vsel %vm271, %v219, -inf
    %v308 = vrot.slane %v307, 4
    %v309 = vmax.f32 %v307, %v308
    %v310 = vrot.slane %v309, 2
    %v311 = vmax.f32 %v309, %v310
    %v312 = vrot.slane %v311, 1
    %v313 = vmax.f32 %v311, %v312
    %v314 = vsel %vm271, %v218, -inf
    %v315 = vrot.slane %v314, 4
    %v316 = vmax.f32 %v314, %v315
    %v317 = vrot.slane %v316, 2
    %v318 = vmax.f32 %v316, %v317
    %v319 = vrot.slane %v318, 1
    %v320 = vmax.f32 %v318, %v319
    %v321 = vsel %vm271, %v220, -inf
    %v322 = vrot.slane %v321, 4
    %v323 = vmax.f32 %v321, %v322
    %v324 = vrot.slane %v323, 2
    %v325 = vmax.f32 %v323, %v324
    %v326 = vrot.slane %v325, 1
    %v327 = vmax.f32 %v325, %v326
    %v328 = vsel %vm271, %v228, -inf
    %v329 = vrot.slane %v328, 4
    %v330 = vmax.f32 %v328, %v329
    %v331 = vrot.slane %v330, 2
    %v332 = vmax.f32 %v330, %v331
    %v333 = vrot.slane %v332, 1
    %v334 = vmax.f32 %v332, %v333
    %v335 = vsel %vm271, %v236, -inf
    %v336 = vrot.slane %v335, 4
    %v337 = vmax.f32 %v335, %v336
    %v338 = vrot.slane %v337, 2
    %v339 = vmax.f32 %v337, %v338
    %v340 = vrot.slane %v339, 1
    %v341 = vmax.f32 %v339, %v340
    %v342 = vsel %vm271, %v235, -inf
    %v343 = vrot.slane %v342, 4
    %v344 = vmax.f32 %v342, %v343
    %v345 = vrot.slane %v344, 2
    %v346 = vmax.f32 %v344, %v345
    %v347 = vrot.slane %v346, 1
    %v348 = vmax.f32 %v346, %v347
    %v349 = vsel %vm271, %v237, -inf
    %v350 = vrot.slane %v349, 4
    %v351 = vmax.f32 %v349, %v350
    %v352 = vrot.slane %v351, 2
    %v353 = vmax.f32 %v351, %v352
    %v354 = vrot.slane %v353, 1
    %v355 = vmax.f32 %v353, %v354
    %v356 = vsel %vm271, %v245, -inf
    %v357 = vrot.slane %v356, 4
    %v358 = vmax.f32 %v356, %v357
    %v359 = vrot.slane %v358, 2
    %v360 = vmax.f32 %v358, %v359
    %v361 = vrot.slane %v360, 1
    %v362 = vmax.f32 %v360, %v361
    %v363 = vsel %vm271, %v253, -inf
    %v364 = vrot.slane %v363, 4
    %v365 = vmax.f32 %v363, %v364
    %v366 = vrot.slane %v365, 2
    %v367 = vmax.f32 %v365, %v366
    %v368 = vrot.slane %v367, 1
    %v369 = vmax.f32 %v367, %v368
    %v370 = vsel %vm271, %v252, -inf
    %v371 = vrot.slane %v370, 4
    %v372 = vmax.f32 %v370, %v371
    %v373 = vrot.slane %v372, 2
    %v374 = vmax.f32 %v372, %v373
    %v375 = vrot.slane %v374, 1
    %v376 = vmax.f32 %v374, %v375
    %v377 = vsel %vm271, %v254, -inf
    %v378 = vrot.slane %v377, 4
    %v379 = vmax.f32 %v377, %v378
    %v380 = vrot.slane %v379, 2
    %v381 = vmax.f32 %v379, %v380
    %v382 = vrot.slane %v381, 1
    %v383 = vmax.f32 %v381, %v382
    %vm384 = vcmask 516096
    %385 = vst.msk [vmem:[#allocation2] sm:$0x1] %vm384, 0.0
    %386 = vst.msk [vmem:[#allocation2 + $0x10] sm:$0x1] %vm384, 0.0
    %387 = vst.msk [vmem:[#allocation2 + $0x9] sm:$0x1] %vm384, 0.0
    %388 = vst.msk [vmem:[#allocation2 + $0x19] sm:$0x1] %vm384, 0.0
    %vm405 = vcmask 1041409
    %v406 = vsel %vm405, %v285, %v278
    %vm407 = vcmask 1042434
    %v408 = vsel %vm407, %v292, %v406
    %vm409 = vcmask 1043459
    %v410 = vsel %vm409, %v299, %v408
    %vm411 = vcmask 1044484
    %v412 = vsel %vm411, %v306, %v410
    %vm413 = vcmask 1045509
    %v414 = vsel %vm413, %v313, %v412
    %vm415 = vcmask 1046534
    %v416 = vsel %vm415, %v320, %v414
    %vm417 = vcmask 1047559
    %v418 = vsel %vm417, %v327, %v416
    %v419 = vsel %vm405, %v341, %v334
    %v420 = vsel %vm407, %v348, %v419
    %v421 = vsel %vm409, %v355, %v420
    %v422 = vsel %vm411, %v362, %v421
    %v423 = vsel %vm413, %v369, %v422
    %v424 = vsel %vm415, %v376, %v423
    %v425 = vsel %vm417, %v383, %v424
    %vm428 = vcmask 523264
    %429 = vst.msk [vmem:[#allocation2 + $0x1] sm:$0xff] %vm428, %v418
    %430 = vst.msk [vmem:[#allocation2 + $0x11] sm:$0xff] %vm428, %v425
    %v431 = vld [vmem:[%s4] sm:$0x1]
    %v433 = vlaneseq
    %v434 = vshrl.u32 %v433, 7
    %v435 = vsub.s32 0, %v434
    %v436 = vrot.slane %v431, %v435
    %v438 = vadd.f32 %v436, 0.0
    %v439 = vld [vmem:[#allocation2] sm:$0xff]
    %v440 = vld [vmem:[#allocation2 + $0x10] sm:$0xff]
    %v441 = vld [vmem:[%s3] sm:$0xff]
    %v442 = vld [vmem:[%s3 + $0x8] sm:$0xff]
    %v443 = vld [vmem:[%s3 + $0x10] sm:$0xff]
    %v444 = vld [vmem:[%s3 + $0x18] sm:$0xff]
    %v445 = vld [vmem:[%s3 + $0x20] sm:$0xff]
    %v446 = vld [vmem:[%s3 + $0x28] sm:$0xff]
    %v447 = vld [vmem:[%s3 + $0x30] sm:$0xff]
    %v448 = vld [vmem:[%s3 + $0x38] sm:$0xff]
    %v450 = vsel %vm428, %v439, 0
    %v453 = vsel %vm428, %v440, 0
    %455 = vmatprep.subr.mxu0 0.0
    %456 = vmatpush1.msra.mxu0 0.0
    %457 = vmatprep.subr.mxu0 0.0
    %458 = vmatpush1.msra.mxu0 0.0
    %459 = vmatprep.subr.mxu0 0.0
    %460 = vmatpush1.msra.mxu0 0.0
    %461 = vmatprep.subr.mxu0 0.0
    %462 = vmatpush1.msra.mxu0 0.0
    %463 = vmatprep.subr.mxu0 0.0
    %464 = vmatpush1.msra.mxu0 0.0
    %465 = vmatprep.subr.mxu0 0.0
    %466 = vmatpush1.msra.mxu0 0.0
    %467 = vmatprep.subr.mxu0 0.0
    %468 = vmatpush1.msra.mxu0 0.0
    %469 = vmatprep.subr.mxu0 0.0
    %470 = vmatpush1.msra.mxu0 0.0
    %471 = vmatprep.subr.mxu0 0.0
    %472 = vmatpush1.msra.mxu0 %v448
    %473 = vmatprep.subr.mxu0 0.0
    %474 = vmatpush1.msra.mxu0 %v447
    %475 = vmatprep.subr.mxu0 0.0
    %476 = vmatpush1.msra.mxu0 %v446
    %477 = vmatprep.subr.mxu0 0.0
    %478 = vmatpush1.msra.mxu0 %v445
    %479 = vmatprep.subr.mxu0 0.0
    %480 = vmatpush1.msra.mxu0 %v444
    %481 = vmatprep.subr.mxu0 0.0
    %482 = vmatpush1.msra.mxu0 %v443
    %483 = vmatprep.subr.mxu0 0.0
    %484 = vmatpush1.msra.mxu0 %v442
    %485 = vmatprep.subr.mxu0 0.0
    %486 = vmatpush1.msra.mxu0 %v441
    %487 = vmatprep.subr.mxu0 0.0
    %488 = vmatpush2.msra.mxu0 0.0
    %489 = vmatprep.subr.mxu0 0.0
    %490 = vmatpush2.msra.mxu0 0.0
    %491 = vmatprep.subr.mxu0 0.0
    %492 = vmatpush2.msra.mxu0 0.0
    %493 = vmatprep.subr.mxu0 0.0
    %494 = vmatpush2.msra.mxu0 0.0
    %495 = vmatprep.subr.mxu0 0.0
    %496 = vmatpush2.msra.mxu0 0.0
    %497 = vmatprep.subr.mxu0 0.0
    %498 = vmatpush2.msra.mxu0 0.0
    %499 = vmatprep.subr.mxu0 0.0
    %500 = vmatpush2.msra.mxu0 0.0
    %501 = vmatprep.subr.mxu0 0.0
    %502 = vmatpush2.msra.mxu0 0.0
    %503 = vmatprep.subr.mxu0 0.0
    %504 = vmatpush2.msra.mxu0 0.0
    %505 = vmatprep.subr.mxu0 0.0
    %506 = vmatpush2.msra.mxu0 0.0
    %507 = vmatprep.subr.mxu0 0.0
    %508 = vmatpush2.msra.mxu0 0.0
    %509 = vmatprep.subr.mxu0 0.0
    %510 = vmatpush2.msra.mxu0 0.0
    %511 = vmatprep.subr.mxu0 0.0
    %512 = vmatpush2.msra.mxu0 0.0
    %513 = vmatprep.subr.mxu0 0.0
    %514 = vmatpush2.msra.mxu0 0.0
    %515 = vmatprep.subr.mxu0 0.0
    %516 = vmatpush2.msra.mxu0 0.0
    %517 = vmatprep.subr.mxu0 0.0
    %518 = vmatpush2.msra.mxu0 0.0
    %519 = vmatprep.mubr.f32.mxu0 0.0
    %520 = vmatmul.mubr.f32.gmra.mxu0 %v450
    %v521 = vpop.f32.mrf.mxu0
    %v522 = vadd.f32 0.0, %v521
    %v523 = vpop.f32.mrf.mxu0
    %524 = vmatprep.mubr.f32.mxu0 0.0
    %525 = vmatmul.mubr.f32.gmra.mxu0 %v453
    %v526 = vpop.f32.mrf.mxu0
    %v527 = vadd.f32 0.0, %v526
    %v528 = vpop.f32.mrf.mxu0
    %529 = vdwg.mxu0
    %v530 = vadd.f32 %v438, %v522
    %v531 = vadd.f32 %v438, %v527
    %v532 = vld [vmem:[#allocation2 + $0x1] sm:$0xff]
    %v533 = vld [vmem:[#allocation2 + $0x11] sm:$0xff]
    %s534 = scalar_lea.vmem %s3, 64
    %v535 = vld [vmem:[%s534] sm:$0xff]
    %v536 = vld [vmem:[%s534 + $0x8] sm:$0xff]
    %v537 = vld [vmem:[%s534 + $0x10] sm:$0xff]
    %v538 = vld [vmem:[%s534 + $0x18] sm:$0xff]
    %v539 = vld [vmem:[%s534 + $0x20] sm:$0xff]
    %v540 = vld [vmem:[%s534 + $0x28] sm:$0xff]
    %v541 = vld [vmem:[%s534 + $0x30] sm:$0xff]
    %v542 = vld [vmem:[%s534 + $0x38] sm:$0xff]
    %v544 = vsel %vm428, %v532, 0
    %v547 = vsel %vm428, %v533, 0
    %549 = vmatprep.subr.mxu0 0.0
    %550 = vmatpush1.msra.mxu0 0.0
    %551 = vmatprep.subr.mxu0 0.0
    %552 = vmatpush1.msra.mxu0 0.0
    %553 = vmatprep.subr.mxu0 0.0
    %554 = vmatpush1.msra.mxu0 0.0
    %555 = vmatprep.subr.mxu0 0.0
    %556 = vmatpush1.msra.mxu0 0.0
    %557 = vmatprep.subr.mxu0 0.0
    %558 = vmatpush1.msra.mxu0 0.0
    %559 = vmatprep.subr.mxu0 0.0
    %560 = vmatpush1.msra.mxu0 0.0
    %561 = vmatprep.subr.mxu0 0.0
    %562 = vmatpush1.msra.mxu0 0.0
    %563 = vmatprep.subr.mxu0 0.0
    %564 = vmatpush1.msra.mxu0 0.0
    %565 = vmatprep.subr.mxu0 0.0
    %566 = vmatpush1.msra.mxu0 %v542
    %567 = vmatprep.subr.mxu0 0.0
    %568 = vmatpush1.msra.mxu0 %v541
    %569 = vmatprep.subr.mxu0 0.0
    %570 = vmatpush1.msra.mxu0 %v540
    %571 = vmatprep.subr.mxu0 0.0
    %572 = vmatpush1.msra.mxu0 %v539
    %573 = vmatprep.subr.mxu0 0.0
    %574 = vmatpush1.msra.mxu0 %v538
    %575 = vmatprep.subr.mxu0 0.0
    %576 = vmatpush1.msra.mxu0 %v537
    %577 = vmatprep.subr.mxu0 0.0
    %578 = vmatpush1.msra.mxu0 %v536
    %579 = vmatprep.subr.mxu0 0.0
    %580 = vmatpush1.msra.mxu0 %v535
    %581 = vmatprep.subr.mxu0 0.0
    %582 = vmatpush2.msra.mxu0 0.0
    %583 = vmatprep.subr.mxu0 0.0
    %584 = vmatpush2.msra.mxu0 0.0
    %585 = vmatprep.subr.mxu0 0.0
    %586 = vmatpush2.msra.mxu0 0.0
    %587 = vmatprep.subr.mxu0 0.0
    %588 = vmatpush2.msra.mxu0 0.0
    %589 = vmatprep.subr.mxu0 0.0
    %590 = vmatpush2.msra.mxu0 0.0
    %591 = vmatprep.subr.mxu0 0.0
    %592 = vmatpush2.msra.mxu0 0.0
    %593 = vmatprep.subr.mxu0 0.0
    %594 = vmatpush2.msra.mxu0 0.0
    %595 = vmatprep.subr.mxu0 0.0
    %596 = vmatpush2.msra.mxu0 0.0
    %597 = vmatprep.subr.mxu0 0.0
    %598 = vmatpush2.msra.mxu0 0.0
    %599 = vmatprep.subr.mxu0 0.0
    %600 = vmatpush2.msra.mxu0 0.0
    %601 = vmatprep.subr.mxu0 0.0
    %602 = vmatpush2.msra.mxu0 0.0
    %603 = vmatprep.subr.mxu0 0.0
    %604 = vmatpush2.msra.mxu0 0.0
    %605 = vmatprep.subr.mxu0 0.0
    %606 = vmatpush2.msra.mxu0 0.0
    %607 = vmatprep.subr.mxu0 0.0
    %608 = vmatpush2.msra.mxu0 0.0
    %609 = vmatprep.subr.mxu0 0.0
    %610 = vmatpush2.msra.mxu0 0.0
    %611 = vmatprep.subr.mxu0 0.0
    %612 = vmatpush2.msra.mxu0 0.0
    %613 = vmatprep.mubr.f32.mxu0 0.0
    %614 = vmatmul.mubr.f32.gmra.mxu0 %v544
    %v615 = vpop.f32.mrf.mxu0
    %v616 = vadd.f32 0.0, %v615
    %v617 = vpop.f32.mrf.mxu0
    %618 = vmatprep.mubr.f32.mxu0 0.0
    %619 = vmatmul.mubr.f32.gmra.mxu0 %v547
    %v620 = vpop.f32.mrf.mxu0
    %v621 = vadd.f32 0.0, %v620
    %v622 = vpop.f32.mrf.mxu0
    %623 = vdwg.mxu0
    %v624 = vadd.f32 %v530, %v616
    %v625 = vadd.f32 %v531, %v621
    %v626 = vld [vmem:[#allocation2 + $0x2] sm:$0xff]
    %v627 = vld [vmem:[#allocation2 + $0x12] sm:$0xff]
    %s628 = scalar_lea.vmem %s3, 128
    %v629 = vld [vmem:[%s628] sm:$0xff]
    %v630 = vld [vmem:[%s628 + $0x8] sm:$0xff]
    %v631 = vld [vmem:[%s628 + $0x10] sm:$0xff]
    %v632 = vld [vmem:[%s628 + $0x18] sm:$0xff]
    %v633 = vld [vmem:[%s628 + $0x20] sm:$0xff]
    %v634 = vld [vmem:[%s628 + $0x28] sm:$0xff]
    %v635 = vld [vmem:[%s628 + $0x30] sm:$0xff]
    %v636 = vld [vmem:[%s628 + $0x38] sm:$0xff]
    %v638 = vsel %vm428, %v626, 0
    %v641 = vsel %vm428, %v627, 0
    %643 = vmatprep.subr.mxu0 0.0
    %644 = vmatpush1.msra.mxu0 0.0
    %645 = vmatprep.subr.mxu0 0.0
    %646 = vmatpush1.msra.mxu0 0.0
    %647 = vmatprep.subr.mxu0 0.0
    %648 = vmatpush1.msra.mxu0 0.0
    %649 = vmatprep.subr.mxu0 0.0
    %650 = vmatpush1.msra.mxu0 0.0
    %651 = vmatprep.subr.mxu0 0.0
    %652 = vmatpush1.msra.mxu0 0.0
    %653 = vmatprep.subr.mxu0 0.0
    %654 = vmatpush1.msra.mxu0 0.0
    %655 = vmatprep.subr.mxu0 0.0
    %656 = vmatpush1.msra.mxu0 0.0
    %657 = vmatprep.subr.mxu0 0.0
    %658 = vmatpush1.msra.mxu0 0.0
    %659 = vmatprep.subr.mxu0 0.0
    %660 = vmatpush1.msra.mxu0 %v636
    %661 = vmatprep.subr.mxu0 0.0
    %662 = vmatpush1.msra.mxu0 %v635
    %663 = vmatprep.subr.mxu0 0.0
    %664 = vmatpush1.msra.mxu0 %v634
    %665 = vmatprep.subr.mxu0 0.0
    %666 = vmatpush1.msra.mxu0 %v633
    %667 = vmatprep.subr.mxu0 0.0
    %668 = vmatpush1.msra.mxu0 %v632
    %669 = vmatprep.subr.mxu0 0.0
    %670 = vmatpush1.msra.mxu0 %v631
    %671 = vmatprep.subr.mxu0 0.0
    %672 = vmatpush1.msra.mxu0 %v630
    %673 = vmatprep.subr.mxu0 0.0
    %674 = vmatpush1.msra.mxu0 %v629
    %675 = vmatprep.subr.mxu0 0.0
    %676 = vmatpush2.msra.mxu0 0.0
    %677 = vmatprep.subr.mxu0 0.0
    %678 = vmatpush2.msra.mxu0 0.0
    %679 = vmatprep.subr.mxu0 0.0
    %680 = vmatpush2.msra.mxu0 0.0
    %681 = vmatprep.subr.mxu0 0.0
    %682 = vmatpush2.msra.mxu0 0.0
    %683 = vmatprep.subr.mxu0 0.0
    %684 = vmatpush2.msra.mxu0 0.0
    %685 = vmatprep.subr.mxu0 0.0
    %686 = vmatpush2.msra.mxu0 0.0
    %687 = vmatprep.subr.mxu0 0.0
    %688 = vmatpush2.msra.mxu0 0.0
    %689 = vmatprep.subr.mxu0 0.0
    %690 = vmatpush2.msra.mxu0 0.0
    %691 = vmatprep.subr.mxu0 0.0
    %692 = vmatpush2.msra.mxu0 0.0
    %693 = vmatprep.subr.mxu0 0.0
    %694 = vmatpush2.msra.mxu0 0.0
    %695 = vmatprep.subr.mxu0 0.0
    %696 = vmatpush2.msra.mxu0 0.0
    %697 = vmatprep.subr.mxu0 0.0
    %698 = vmatpush2.msra.mxu0 0.0
    %699 = vmatprep.subr.mxu0 0.0
    %700 = vmatpush2.msra.mxu0 0.0
    %701 = vmatprep.subr.mxu0 0.0
    %702 = vmatpush2.msra.mxu0 0.0
    %703 = vmatprep.subr.mxu0 0.0
    %704 = vmatpush2.msra.mxu0 0.0
    %705 = vmatprep.subr.mxu0 0.0
    %706 = vmatpush2.msra.mxu0 0.0
    %707 = vmatprep.mubr.f32.mxu0 0.0
    %708 = vmatmul.mubr.f32.gmra.mxu0 %v638
    %v709 = vpop.f32.mrf.mxu0
    %v710 = vadd.f32 0.0, %v709
    %v711 = vpop.f32.mrf.mxu0
    %712 = vmatprep.mubr.f32.mxu0 0.0
    %713 = vmatmul.mubr.f32.gmra.mxu0 %v641
    %v714 = vpop.f32.mrf.mxu0
    %v715 = vadd.f32 0.0, %v714
    %v716 = vpop.f32.mrf.mxu0
    %717 = vdwg.mxu0
    %v718 = vadd.f32 %v624, %v710
    %v719 = vadd.f32 %v625, %v715
    %v720 = vmax.f32 %v718, 0.0
    %v721 = vmax.f32 %v719, 0.0
    %v724 = vcombine.high %v720, %v720
    %v726 = vunpack.c.l.s4 1983009808
    %v727 = vunpack.c.0.s8 %v726
    %v728 = vlaneseq
    %v729 = vshrl.u32 %v728, 7
    %v730 = vsub.s32 %v727, %v729
    %v731 = vrot.slane %v720, %v730
    %v733 = vunpack.c.l.s4 1983009808
    %v734 = vunpack.c.0.s8 %v733
    %v735 = vlaneseq
    %v736 = vshrl.u32 %v735, 7
    %v737 = vsub.s32 %v734, %v736
    %v738 = vrot.slane %v724, %v737
    %v739 = vcombine.high %v731, %v731
    %v740 = vcombine.high %v738, %v738
    %v741 = vcombine.high %v721, %v721
    %v743 = vunpack.c.l.s4 1983009808
    %v744 = vunpack.c.0.s8 %v743
    %v745 = vlaneseq
    %v746 = vshrl.u32 %v745, 7
    %v747 = vsub.s32 %v744, %v746
    %v748 = vrot.slane %v721, %v747
    %v750 = vunpack.c.l.s4 1983009808
    %v751 = vunpack.c.0.s8 %v750
    %v752 = vlaneseq
    %v753 = vshrl.u32 %v752, 7
    %v754 = vsub.s32 %v751, %v753
    %v755 = vrot.slane %v741, %v754
    %v756 = vcombine.high %v748, %v748
    %v757 = vcombine.high %v755, %v755
    %vm766 = vcmask 1041408
    %v767 = vsel %vm766, %v731, -inf
    %v768 = vrot.slane %v767, 4
    %v769 = vmax.f32 %v767, %v768
    %v770 = vrot.slane %v769, 2
    %v771 = vmax.f32 %v769, %v770
    %v772 = vrot.slane %v771, 1
    %v773 = vmax.f32 %v771, %v772
    %v774 = vsel %vm766, %v739, -inf
    %v775 = vrot.slane %v774, 4
    %v776 = vmax.f32 %v774, %v775
    %v777 = vrot.slane %v776, 2
    %v778 = vmax.f32 %v776, %v777
    %v779 = vrot.slane %v778, 1
    %v780 = vmax.f32 %v778, %v779
    %v781 = vsel %vm766, %v738, -inf
    %v782 = vrot.slane %v781, 4
    %v783 = vmax.f32 %v781, %v782
    %v784 = vrot.slane %v783, 2
    %v785 = vmax.f32 %v783, %v784
    %v786 = vrot.slane %v785, 1
    %v787 = vmax.f32 %v785, %v786
    %v788 = vsel %vm766, %v740, -inf
    %v789 = vrot.slane %v788, 4
    %v790 = vmax.f32 %v788, %v789
    %v791 = vrot.slane %v790, 2
    %v792 = vmax.f32 %v790, %v791
    %v793 = vrot.slane %v792, 1
    %v794 = vmax.f32 %v792, %v793
    %v795 = vsel %vm766, %v748, -inf
    %v796 = vrot.slane %v795, 4
    %v797 = vmax.f32 %v795, %v796
    %v798 = vrot.slane %v797, 2
    %v799 = vmax.f32 %v797, %v798
    %v800 = vrot.slane %v799, 1
    %v801 = vmax.f32 %v799, %v800
    %v802 = vsel %vm766, %v756, -inf
    %v803 = vrot.slane %v802, 4
    %v804 = vmax.f32 %v802, %v803
    %v805 = vrot.slane %v804, 2
    %v806 = vmax.f32 %v804, %v805
    %v807 = vrot.slane %v806, 1
    %v808 = vmax.f32 %v806, %v807
    %v809 = vsel %vm766, %v755, -inf
    %v810 = vrot.slane %v809, 4
    %v811 = vmax.f32 %v809, %v810
    %v812 = vrot.slane %v811, 2
    %v813 = vmax.f32 %v811, %v812
    %v814 = vrot.slane %v813, 1
    %v815 = vmax.f32 %v813, %v814
    %v816 = vsel %vm766, %v757, -inf
    %v817 = vrot.slane %v816, 4
    %v818 = vmax.f32 %v816, %v817
    %v819 = vrot.slane %v818, 2
    %v820 = vmax.f32 %v818, %v819
    %v821 = vrot.slane %v820, 1
    %v822 = vmax.f32 %v820, %v821
    %v823 = vld [vmem:[#allocation3] sm:$0xff]
    %v824 = vld [vmem:[#allocation3 + $0x8] sm:$0xff]
    %v825 = vld [vmem:[#allocation3 + $0x10] sm:$0xff]
    %v826 = vld [vmem:[#allocation3 + $0x18] sm:$0xff]
    %v827 = vld [vmem:[#allocation3 + $0x20] sm:$0xff]
    %v828 = vld [vmem:[#allocation3 + $0x28] sm:$0xff]
    %v829 = vld [vmem:[#allocation3 + $0x30] sm:$0xff]
    %v830 = vld [vmem:[#allocation3 + $0x38] sm:$0xff]
    %v831 = vld [vmem:[#allocation3 + $0x40] sm:$0xff]
    %v832 = vld [vmem:[#allocation3 + $0x48] sm:$0xff]
    %v833 = vld [vmem:[#allocation3 + $0x50] sm:$0xff]
    %v834 = vld [vmem:[#allocation3 + $0x58] sm:$0xff]
    %v835 = vld [vmem:[#allocation3 + $0x60] sm:$0xff]
    %v836 = vld [vmem:[#allocation3 + $0x68] sm:$0xff]
    %v837 = vld [vmem:[#allocation3 + $0x70] sm:$0xff]
    %v838 = vld [vmem:[#allocation3 + $0x78] sm:$0xff]
    %v839 = vld [vmem:[#allocation3 + $0x80] sm:$0xff]
    %v840 = vld [vmem:[#allocation3 + $0x88] sm:$0xff]
    %v841 = vld [vmem:[#allocation3 + $0x90] sm:$0xff]
    %v842 = vld [vmem:[#allocation3 + $0x98] sm:$0xff]
    %v843 = vld [vmem:[#allocation3 + $0xa0] sm:$0xff]
    %v844 = vld [vmem:[#allocation3 + $0xa8] sm:$0xff]
    %v845 = vld [vmem:[#allocation3 + $0xb0] sm:$0xff]
    %v846 = vld [vmem:[#allocation3 + $0xb8] sm:$0xff]
    %v847 = vld [vmem:[#allocation3 + $0xc0] sm:$0xff]
    %v848 = vld [vmem:[#allocation3 + $0xc8] sm:$0xff]
    %v849 = vld [vmem:[#allocation3 + $0xd0] sm:$0xff]
    %v850 = vld [vmem:[#allocation3 + $0xd8] sm:$0xff]
    %v851 = vld [vmem:[#allocation3 + $0xe0] sm:$0xff]
    %v852 = vld [vmem:[#allocation3 + $0xe8] sm:$0xff]
    %v853 = vld [vmem:[#allocation3 + $0xf0] sm:$0xff]
    %v854 = vld [vmem:[#allocation3 + $0xf8] sm:$0xff]
    %v855 = vld [vmem:[#allocation3 + $0x100] sm:$0xff]
    %v856 = vld [vmem:[#allocation3 + $0x108] sm:$0xff]
    %v857 = vld [vmem:[#allocation3 + $0x110] sm:$0xff]
    %v858 = vld [vmem:[#allocation3 + $0x118] sm:$0xff]
    %v859 = vld [vmem:[#allocation3 + $0x120] sm:$0xff]
    %v860 = vld [vmem:[#allocation3 + $0x128] sm:$0xff]
    %v861 = vld [vmem:[#allocation3 + $0x130] sm:$0xff]
    %v862 = vld [vmem:[#allocation3 + $0x138] sm:$0xff]
    %v863 = vld [vmem:[#allocation3 + $0x140] sm:$0xff]
    %v864 = vld [vmem:[#allocation3 + $0x148] sm:$0xff]
    %v865 = vld [vmem:[#allocation3 + $0x150] sm:$0xff]
    %v866 = vld [vmem:[#allocation3 + $0x158] sm:$0xff]
    %v867 = vld [vmem:[#allocation3 + $0x160] sm:$0xff]
    %v868 = vld [vmem:[#allocation3 + $0x168] sm:$0xff]
    %v869 = vld [vmem:[#allocation3 + $0x170] sm:$0xff]
    %v870 = vld [vmem:[#allocation3 + $0x178] sm:$0xff]
    %v871 = vld [vmem:[#allocation3 + $0x180] sm:$0xff]
    %v872 = vld [vmem:[#allocation3 + $0x188] sm:$0xff]
    %v873 = vld [vmem:[#allocation3 + $0x190] sm:$0xff]
    %v874 = vld [vmem:[#allocation3 + $0x198] sm:$0xff]
    %v875 = vld [vmem:[#allocation3 + $0x1a0] sm:$0xff]
    %v876 = vld [vmem:[#allocation3 + $0x1a8] sm:$0xff]
    %v877 = vld [vmem:[#allocation3 + $0x1b0] sm:$0xff]
    %v878 = vld [vmem:[#allocation3 + $0x1b8] sm:$0xff]
    %v879 = vld [vmem:[#allocation3 + $0x1c0] sm:$0xff]
    %v880 = vld [vmem:[#allocation3 + $0x1c8] sm:$0xff]
    %v881 = vld [vmem:[#allocation3 + $0x1d0] sm:$0xff]
    %v882 = vld [vmem:[#allocation3 + $0x1d8] sm:$0xff]
    %v883 = vld [vmem:[#allocation3 + $0x1e0] sm:$0xff]
    %v884 = vld [vmem:[#allocation3 + $0x1e8] sm:$0xff]
    %v885 = vld [vmem:[#allocation3 + $0x1f0] sm:$0xff]
    %v886 = vld [vmem:[#allocation3 + $0x1f8] sm:$0xff]
    %v887 = vld [vmem:[%s7] sm:$0xf]
    %v889 = vlaneseq
    %v890 = vshrl.u32 %v889, 7
    %v891 = vsub.s32 0, %v890
    %v892 = vrot.slane %v887, %v891
    %v893 = vlaneseq
    %v894 = vshrl.u32 %v893, 7
    %v895 = vsub.s32 1, %v894
    %v896 = vrot.slane %v887, %v895
    %v897 = vlaneseq
    %v898 = vshrl.u32 %v897, 7
    %v899 = vsub.s32 2, %v898
    %v900 = vrot.slane %v887, %v899
    %v901 = vlaneseq
    %v902 = vshrl.u32 %v901, 7
    %v903 = vsub.s32 3, %v902
    %v904 = vrot.slane %v887, %v903
    %v917 = vsel %vm405, %v780, %v773
    %v918 = vsel %vm407, %v787, %v917
    %v919 = vsel %vm409, %v794, %v918
    %v920 = vsel %vm411, %v801, %v919
    %v921 = vsel %vm413, %v808, %v920
    %v922 = vsel %vm415, %v815, %v921
    %v923 = vsel %vm417, %v822, %v922
    %925 = vmatprep.subr.mxu0 %v884
    %926 = vmatpush1.msra.mxu0 %v883
    %927 = vmatprep.subr.mxu0 %v880
    %928 = vmatpush1.msra.mxu0 %v879
    %929 = vmatprep.subr.mxu0 %v876
    %930 = vmatpush1.msra.mxu0 %v875
    %931 = vmatprep.subr.mxu0 %v872
    %932 = vmatpush1.msra.mxu0 %v871
    %933 = vmatprep.subr.mxu0 %v868
    %934 = vmatpush1.msra.mxu0 %v867
    %935 = vmatprep.subr.mxu0 %v864
    %936 = vmatpush1.msra.mxu0 %v863
    %937 = vmatprep.subr.mxu0 %v860
    %938 = vmatpush1.msra.mxu0 %v859
    %939 = vmatprep.subr.mxu0 %v856
    %940 = vmatpush1.msra.mxu0 %v855
    %941 = vmatprep.subr.mxu0 %v852
    %942 = vmatpush1.msra.mxu0 %v851
    %943 = vmatprep.subr.mxu0 %v848
    %944 = vmatpush1.msra.mxu0 %v847
    %945 = vmatprep.subr.mxu0 %v844
    %946 = vmatpush1.msra.mxu0 %v843
    %947 = vmatprep.subr.mxu0 %v840
    %948 = vmatpush1.msra.mxu0 %v839
    %949 = vmatprep.subr.mxu0 %v836
    %950 = vmatpush1.msra.mxu0 %v835
    %951 = vmatprep.subr.mxu0 %v832
    %952 = vmatpush1.msra.mxu0 %v831
    %953 = vmatprep.subr.mxu0 %v828
    %954 = vmatpush1.msra.mxu0 %v827
    %955 = vmatprep.subr.mxu0 %v824
    %956 = vmatpush1.msra.mxu0 %v823
    %957 = vmatprep.subr.mxu0 0.0
    %958 = vmatpush2.msra.mxu0 0.0
    %959 = vmatprep.subr.mxu0 0.0
    %960 = vmatpush2.msra.mxu0 0.0
    %961 = vmatprep.subr.mxu0 0.0
    %962 = vmatpush2.msra.mxu0 0.0
    %963 = vmatprep.subr.mxu0 0.0
    %964 = vmatpush2.msra.mxu0 0.0
    %965 = vmatprep.subr.mxu0 0.0
    %966 = vmatpush2.msra.mxu0 0.0
    %967 = vmatprep.subr.mxu0 0.0
    %968 = vmatpush2.msra.mxu0 0.0
    %969 = vmatprep.subr.mxu0 0.0
    %970 = vmatpush2.msra.mxu0 0.0
    %971 = vmatprep.subr.mxu0 0.0
    %972 = vmatpush2.msra.mxu0 0.0
    %973 = vmatprep.subr.mxu0 0.0
    %974 = vmatpush2.msra.mxu0 0.0
    %975 = vmatprep.subr.mxu0 0.0
    %976 = vmatpush2.msra.mxu0 0.0
    %977 = vmatprep.subr.mxu0 0.0
    %978 = vmatpush2.msra.mxu0 0.0
    %979 = vmatprep.subr.mxu0 0.0
    %980 = vmatpush2.msra.mxu0 0.0
    %981 = vmatprep.subr.mxu0 0.0
    %982 = vmatpush2.msra.mxu0 0.0
    %983 = vmatprep.subr.mxu0 0.0
    %984 = vmatpush2.msra.mxu0 0.0
    %985 = vmatprep.subr.mxu0 0.0
    %986 = vmatpush2.msra.mxu0 0.0
    %987 = vmatprep.subr.mxu0 0.0
    %988 = vmatpush2.msra.mxu0 0.0
    %989 = vmatprep.mubr.f32.mxu0 0.0
    %990 = vmatmul.mubr.f32.gmra.mxu0 %v923
    %v991 = vpop.f32.mrf.mxu0
    %v992 = vadd.f32 %v892, %v991
    %v993 = vpop.f32.mrf.mxu0
    %v994 = vadd.f32 %v896, %v993
    %995 = vdwg.mxu0
    %996 = vmatprep.subr.mxu0 %v886
    %997 = vmatpush1.msra.mxu0 %v885
    %998 = vmatprep.subr.mxu0 %v882
    %999 = vmatpush1.msra.mxu0 %v881
    %1000 = vmatprep.subr.mxu0 %v878
    %1001 = vmatpush1.msra.mxu0 %v877
    %1002 = vmatprep.subr.mxu0 %v874
    %1003 = vmatpush1.msra.mxu0 %v873
    %1004 = vmatprep.subr.mxu0 %v870
    %1005 = vmatpush1.msra.mxu0 %v869
    %1006 = vmatprep.subr.mxu0 %v866
    %1007 = vmatpush1.msra.mxu0 %v865
    %1008 = vmatprep.subr.mxu0 %v862
    %1009 = vmatpush1.msra.mxu0 %v861
    %1010 = vmatprep.subr.mxu0 %v858
    %1011 = vmatpush1.msra.mxu0 %v857
    %1012 = vmatprep.subr.mxu0 %v854
    %1013 = vmatpush1.msra.mxu0 %v853
    %1014 = vmatprep.subr.mxu0 %v850
    %1015 = vmatpush1.msra.mxu0 %v849
    %1016 = vmatprep.subr.mxu0 %v846
    %1017 = vmatpush1.msra.mxu0 %v845
    %1018 = vmatprep.subr.mxu0 %v842
    %1019 = vmatpush1.msra.mxu0 %v841
    %1020 = vmatprep.subr.mxu0 %v838
    %1021 = vmatpush1.msra.mxu0 %v837
    %1022 = vmatprep.subr.mxu0 %v834
    %1023 = vmatpush1.msra.mxu0 %v833
    %1024 = vmatprep.subr.mxu0 %v830
    %1025 = vmatpush1.msra.mxu0 %v829
    %1026 = vmatprep.subr.mxu0 %v826
    %1027 = vmatpush1.msra.mxu0 %v825
    %1028 = vmatprep.subr.mxu0 0.0
    %1029 = vmatpush2.msra.mxu0 0.0
    %1030 = vmatprep.subr.mxu0 0.0
    %1031 = vmatpush2.msra.mxu0 0.0
    %1032 = vmatprep.subr.mxu0 0.0
    %1033 = vmatpush2.msra.mxu0 0.0
    %1034 = vmatprep.subr.mxu0 0.0
    %1035 = vmatpush2.msra.mxu0 0.0
    %1036 = vmatprep.subr.mxu0 0.0
    %1037 = vmatpush2.msra.mxu0 0.0
    %1038 = vmatprep.subr.mxu0 0.0
    %1039 = vmatpush2.msra.mxu0 0.0
    %1040 = vmatprep.subr.mxu0 0.0
    %1041 = vmatpush2.msra.mxu0 0.0
    %1042 = vmatprep.subr.mxu0 0.0
    %1043 = vmatpush2.msra.mxu0 0.0
    %1044 = vmatprep.subr.mxu0 0.0
    %1045 = vmatpush2.msra.mxu0 0.0
    %1046 = vmatprep.subr.mxu0 0.0
    %1047 = vmatpush2.msra.mxu0 0.0
    %1048 = vmatprep.subr.mxu0 0.0
    %1049 = vmatpush2.msra.mxu0 0.0
    %1050 = vmatprep.subr.mxu0 0.0
    %1051 = vmatpush2.msra.mxu0 0.0
    %1052 = vmatprep.subr.mxu0 0.0
    %1053 = vmatpush2.msra.mxu0 0.0
    %1054 = vmatprep.subr.mxu0 0.0
    %1055 = vmatpush2.msra.mxu0 0.0
    %1056 = vmatprep.subr.mxu0 0.0
    %1057 = vmatpush2.msra.mxu0 0.0
    %1058 = vmatprep.subr.mxu0 0.0
    %1059 = vmatpush2.msra.mxu0 0.0
    %1060 = vmatprep.mubr.f32.mxu0 0.0
    %1061 = vmatmul.mubr.f32.gmra.mxu0 %v923
    %v1062 = vpop.f32.mrf.mxu0
    %v1063 = vadd.f32 %v900, %v1062
    %v1064 = vpop.f32.mrf.mxu0
    %v1065 = vadd.f32 %v904, %v1064
    %1066 = vdwg.mxu0
    %v1071 = vcombine.low %v992, %v994
    %v1072 = vcombine.high %v992, %v994
    %v1073 = vcombine.low %v1063, %v1065
    %v1074 = vcombine.high %v1063, %v1065
    %v1079 = vld [vmem:[#allocation6] sm:$0xff]
    %v1080 = vld [vmem:[#allocation6 + $0x8] sm:$0xff]
    %v1081 = vld [vmem:[#allocation6 + $0x10] sm:$0xff]
    %v1082 = vld [vmem:[#allocation6 + $0x18] sm:$0xff]
    %v1083 = vld [vmem:[#allocation6 + $0x20] sm:$0xff]
    %v1084 = vld [vmem:[#allocation6 + $0x28] sm:$0xff]
    %v1085 = vld [vmem:[#allocation6 + $0x30] sm:$0xff]
    %v1086 = vld [vmem:[#allocation6 + $0x38] sm:$0xff]
    %v1087 = vld [vmem:[#allocation6 + $0x40] sm:$0xff]
    %v1088 = vld [vmem:[#allocation6 + $0x48] sm:$0xff]
    %v1089 = vld [vmem:[#allocation6 + $0x50] sm:$0xff]
    %v1090 = vld [vmem:[#allocation6 + $0x58] sm:$0xff]
    %v1091 = vld [vmem:[#allocation6 + $0x60] sm:$0xff]
    %v1092 = vld [vmem:[#allocation6 + $0x68] sm:$0xff]
    %v1093 = vld [vmem:[#allocation6 + $0x70] sm:$0xff]
    %v1094 = vld [vmem:[#allocation6 + $0x78] sm:$0xff]
    %v1095 = vld [vmem:[#allocation6 + $0x80] sm:$0xff]
    %v1096 = vld [vmem:[#allocation6 + $0x88] sm:$0xff]
    %v1097 = vld [vmem:[#allocation6 + $0x90] sm:$0xff]
    %v1098 = vld [vmem:[#allocation6 + $0x98] sm:$0xff]
    %v1099 = vld [vmem:[#allocation6 + $0xa0] sm:$0xff]
    %v1100 = vld [vmem:[#allocation6 + $0xa8] sm:$0xff]
    %v1101 = vld [vmem:[#allocation6 + $0xb0] sm:$0xff]
    %v1102 = vld [vmem:[#allocation6 + $0xb8] sm:$0xff]
    %v1103 = vld [vmem:[#allocation6 + $0xc0] sm:$0xff]
    %v1104 = vld [vmem:[#allocation6 + $0xc8] sm:$0xff]
    %v1105 = vld [vmem:[#allocation6 + $0xd0] sm:$0xff]
    %v1106 = vld [vmem:[#allocation6 + $0xd8] sm:$0xff]
    %v1107 = vld [vmem:[#allocation6 + $0xe0] sm:$0xff]
    %v1108 = vld [vmem:[#allocation6 + $0xe8] sm:$0xff]
    %v1109 = vld [vmem:[#allocation6 + $0xf0] sm:$0xff]
    %v1110 = vld [vmem:[#allocation6 + $0xf8] sm:$0xff]
    %v1111 = vld [vmem:[#allocation6 + $0x100] sm:$0xff]
    %v1112 = vld [vmem:[#allocation6 + $0x108] sm:$0xff]
    %v1113 = vld [vmem:[#allocation6 + $0x110] sm:$0xff]
    %v1114 = vld [vmem:[#allocation6 + $0x118] sm:$0xff]
    %v1115 = vld [vmem:[#allocation6 + $0x120] sm:$0xff]
    %v1116 = vld [vmem:[#allocation6 + $0x128] sm:$0xff]
    %v1117 = vld [vmem:[#allocation6 + $0x130] sm:$0xff]
    %v1118 = vld [vmem:[#allocation6 + $0x138] sm:$0xff]
    %v1119 = vld [vmem:[#allocation6 + $0x140] sm:$0xff]
    %v1120 = vld [vmem:[#allocation6 + $0x148] sm:$0xff]
    %v1121 = vld [vmem:[#allocation6 + $0x150] sm:$0xff]
    %v1122 = vld [vmem:[#allocation6 + $0x158] sm:$0xff]
    %v1123 = vld [vmem:[#allocation6 + $0x160] sm:$0xff]
    %v1124 = vld [vmem:[#allocation6 + $0x168] sm:$0xff]
    %v1125 = vld [vmem:[#allocation6 + $0x170] sm:$0xff]
    %v1126 = vld [vmem:[#allocation6 + $0x178] sm:$0xff]
    %v1127 = vld [vmem:[#allocation6 + $0x180] sm:$0xff]
    %v1128 = vld [vmem:[#allocation6 + $0x188] sm:$0xff]
    %v1129 = vld [vmem:[#allocation6 + $0x190] sm:$0xff]
    %v1130 = vld [vmem:[#allocation6 + $0x198] sm:$0xff]
    %v1131 = vld [vmem:[#allocation6 + $0x1a0] sm:$0xff]
    %v1132 = vld [vmem:[#allocation6 + $0x1a8] sm:$0xff]
    %v1133 = vld [vmem:[#allocation6 + $0x1b0] sm:$0xff]
    %v1134 = vld [vmem:[#allocation6 + $0x1b8] sm:$0xff]
    %v1135 = vld [vmem:[#allocation6 + $0x1c0] sm:$0xff]
    %v1136 = vld [vmem:[#allocation6 + $0x1c8] sm:$0xff]
    %v1137 = vld [vmem:[#allocation6 + $0x1d0] sm:$0xff]
    %v1138 = vld [vmem:[#allocation6 + $0x1d8] sm:$0xff]
    %v1139 = vld [vmem:[#allocation6 + $0x1e0] sm:$0xff]
    %v1140 = vld [vmem:[#allocation6 + $0x1e8] sm:$0xff]
    %v1141 = vld [vmem:[#allocation6 + $0x1f0] sm:$0xff]
    %v1142 = vld [vmem:[#allocation6 + $0x1f8] sm:$0xff]
    %1143 = vmatprep.subr.mxu0 %v1140
    %1144 = vmatpush1.msra.mxu0 %v1139
    %1145 = vmatprep.subr.mxu0 %v1136
    %1146 = vmatpush1.msra.mxu0 %v1135
    %1147 = vmatprep.subr.mxu0 %v1132
    %1148 = vmatpush1.msra.mxu0 %v1131
    %1149 = vmatprep.subr.mxu0 %v1128
    %1150 = vmatpush1.msra.mxu0 %v1127
    %1151 = vmatprep.subr.mxu0 %v1124
    %1152 = vmatpush1.msra.mxu0 %v1123
    %1153 = vmatprep.subr.mxu0 %v1120
    %1154 = vmatpush1.msra.mxu0 %v1119
    %1155 = vmatprep.subr.mxu0 %v1116
    %1156 = vmatpush1.msra.mxu0 %v1115
    %1157 = vmatprep.subr.mxu0 %v1112
    %1158 = vmatpush1.msra.mxu0 %v1111
    %1159 = vmatprep.subr.mxu0 %v1108
    %1160 = vmatpush1.msra.mxu0 %v1107
    %1161 = vmatprep.subr.mxu0 %v1104
    %1162 = vmatpush1.msra.mxu0 %v1103
    %1163 = vmatprep.subr.mxu0 %v1100
    %1164 = vmatpush1.msra.mxu0 %v1099
    %1165 = vmatprep.subr.mxu0 %v1096
    %1166 = vmatpush1.msra.mxu0 %v1095
    %1167 = vmatprep.subr.mxu0 %v1092
    %1168 = vmatpush1.msra.mxu0 %v1091
    %1169 = vmatprep.subr.mxu0 %v1088
    %1170 = vmatpush1.msra.mxu0 %v1087
    %1171 = vmatprep.subr.mxu0 %v1084
    %1172 = vmatpush1.msra.mxu0 %v1083
    %1173 = vmatprep.subr.mxu0 %v1080
    %1174 = vmatpush1.msra.mxu0 %v1079
    %1175 = vmatprep.subr.mxu0 0.0
    %1176 = vmatpush2.msra.mxu0 0.0
    %1177 = vmatprep.subr.mxu0 0.0
    %1178 = vmatpush2.msra.mxu0 0.0
    %1179 = vmatprep.subr.mxu0 0.0
    %1180 = vmatpush2.msra.mxu0 0.0
    %1181 = vmatprep.subr.mxu0 0.0
    %1182 = vmatpush2.msra.mxu0 0.0
    %1183 = vmatprep.subr.mxu0 0.0
    %1184 = vmatpush2.msra.mxu0 0.0
    %1185 = vmatprep.subr.mxu0 0.0
    %1186 = vmatpush2.msra.mxu0 0.0
    %1187 = vmatprep.subr.mxu0 0.0
    %1188 = vmatpush2.msra.mxu0 0.0
    %1189 = vmatprep.subr.mxu0 0.0
    %1190 = vmatpush2.msra.mxu0 0.0
    %1191 = vmatprep.subr.mxu0 0.0
    %1192 = vmatpush2.msra.mxu0 0.0
    %1193 = vmatprep.subr.mxu0 0.0
    %1194 = vmatpush2.msra.mxu0 0.0
    %1195 = vmatprep.subr.mxu0 0.0
    %1196 = vmatpush2.msra.mxu0 0.0
    %1197 = vmatprep.subr.mxu0 0.0
    %1198 = vmatpush2.msra.mxu0 0.0
    %1199 = vmatprep.subr.mxu0 0.0
    %1200 = vmatpush2.msra.mxu0 0.0
    %1201 = vmatprep.subr.mxu0 0.0
    %1202 = vmatpush2.msra.mxu0 0.0
    %1203 = vmatprep.subr.mxu0 0.0
    %1204 = vmatpush2.msra.mxu0 0.0
    %1205 = vmatprep.subr.mxu0 0.0
    %1206 = vmatpush2.msra.mxu0 0.0
    %1207 = vmatprep.mubr.f32.mxu0 0.0
    %1208 = vmatmul.mubr.f32.gmra.mxu0 0.0
    %v1209 = vpop.f32.mrf.mxu0
    %v1210 = vadd.f32 0.0, %v1209
    %v1211 = vpop.f32.mrf.mxu0
    %v1212 = vadd.f32 0.0, %v1211
    %1213 = vdwg.mxu0
    %1214 = vmatprep.subr.mxu0 %v1142
    %1215 = vmatpush1.msra.mxu0 %v1141
    %1216 = vmatprep.subr.mxu0 %v1138
    %1217 = vmatpush1.msra.mxu0 %v1137
    %1218 = vmatprep.subr.mxu0 %v1134
    %1219 = vmatpush1.msra.mxu0 %v1133
    %1220 = vmatprep.subr.mxu0 %v1130
    %1221 = vmatpush1.msra.mxu0 %v1129
    %1222 = vmatprep.subr.mxu0 %v1126
    %1223 = vmatpush1.msra.mxu0 %v1125
    %1224 = vmatprep.subr.mxu0 %v1122
    %1225 = vmatpush1.msra.mxu0 %v1121
    %1226 = vmatprep.subr.mxu0 %v1118
    %1227 = vmatpush1.msra.mxu0 %v1117
    %1228 = vmatprep.subr.mxu0 %v1114
    %1229 = vmatpush1.msra.mxu0 %v1113
    %1230 = vmatprep.subr.mxu0 %v1110
    %1231 = vmatpush1.msra.mxu0 %v1109
    %1232 = vmatprep.subr.mxu0 %v1106
    %1233 = vmatpush1.msra.mxu0 %v1105
    %1234 = vmatprep.subr.mxu0 %v1102
    %1235 = vmatpush1.msra.mxu0 %v1101
    %1236 = vmatprep.subr.mxu0 %v1098
    %1237 = vmatpush1.msra.mxu0 %v1097
    %1238 = vmatprep.subr.mxu0 %v1094
    %1239 = vmatpush1.msra.mxu0 %v1093
    %1240 = vmatprep.subr.mxu0 %v1090
    %1241 = vmatpush1.msra.mxu0 %v1089
    %1242 = vmatprep.subr.mxu0 %v1086
    %1243 = vmatpush1.msra.mxu0 %v1085
    %1244 = vmatprep.subr.mxu0 %v1082
    %1245 = vmatpush1.msra.mxu0 %v1081
    %1246 = vmatprep.subr.mxu0 0.0
    %1247 = vmatpush2.msra.mxu0 0.0
    %1248 = vmatprep.subr.mxu0 0.0
    %1249 = vmatpush2.msra.mxu0 0.0
    %1250 = vmatprep.subr.mxu0 0.0
    %1251 = vmatpush2.msra.mxu0 0.0
    %1252 = vmatprep.subr.mxu0 0.0
    %1253 = vmatpush2.msra.mxu0 0.0
    %1254 = vmatprep.subr.mxu0 0.0
    %1255 = vmatpush2.msra.mxu0 0.0
    %1256 = vmatprep.subr.mxu0 0.0
    %1257 = vmatpush2.msra.mxu0 0.0
    %1258 = vmatprep.subr.mxu0 0.0
    %1259 = vmatpush2.msra.mxu0 0.0
    %1260 = vmatprep.subr.mxu0 0.0
    %1261 = vmatpush2.msra.mxu0 0.0
    %1262 = vmatprep.subr.mxu0 0.0
    %1263 = vmatpush2.msra.mxu0 0.0
    %1264 = vmatprep.subr.mxu0 0.0
    %1265 = vmatpush2.msra.mxu0 0.0
    %1266 = vmatprep.subr.mxu0 0.0
    %1267 = vmatpush2.msra.mxu0 0.0
    %1268 = vmatprep.subr.mxu0 0.0
    %1269 = vmatpush2.msra.mxu0 0.0
    %1270 = vmatprep.subr.mxu0 0.0
    %1271 = vmatpush2.msra.mxu0 0.0
    %1272 = vmatprep.subr.mxu0 0.0
    %1273 = vmatpush2.msra.mxu0 0.0
    %1274 = vmatprep.subr.mxu0 0.0
    %1275 = vmatpush2.msra.mxu0 0.0
    %1276 = vmatprep.subr.mxu0 0.0
    %1277 = vmatpush2.msra.mxu0 0.0
    %1278 = vmatprep.mubr.f32.mxu0 0.0
    %1279 = vmatmul.mubr.f32.gmra.mxu0 0.0
    %v1280 = vpop.f32.mrf.mxu0
    %v1281 = vadd.f32 0.0, %v1280
    %v1282 = vpop.f32.mrf.mxu0
    %v1283 = vadd.f32 0.0, %v1282
    %1284 = vdwg.mxu0
    %v1289 = vcombine.low %v1210, %v1212
    %v1290 = vcombine.low %v1281, %v1283
    %v1291 = vrot.slane %v1289, 1
    %v1292 = vrot.slane %v1290, 1
    %v1297 = vadd.f32 %v1071, %v1289
    %v1298 = vadd.f32 %v1073, %v1290
    %v1299 = vadd.f32 %v1072, %v1291
    %v1300 = vadd.f32 %v1074, %v1292
    %v1301 = vxor.u32 %v1297, 2147483648
    %v1302 = vxor.u32 %v1299, 2147483648
    %v1303 = vmul.f32 %v1301, 1.442695
    %v1304 = vpow.pop %v1303
    %v1305 = vmul.f32 %v1302, 1.442695
    %v1306 = vpow.pop %v1305
    %v1307 = vadd.f32 %v1304, 1.0
    %v1308 = vadd.f32 %v1306, 1.0
    %v1309 = vrcp.pop %v1307
    %v1310 = vmul.f32 1.0, %v1309
    %v1311 = vrcp.pop %v1308
    %v1312 = vmul.f32 1.0, %v1311
    %v1315 = vrot.slane %v1297, 4
    %v1316 = vrot.slane %v1299, 4
    %v1319 = vxor.u32 %v1315, 2147483648
    %v1320 = vxor.u32 %v1316, 2147483648
    %v1321 = vmul.f32 %v1319, 1.442695
    %v1322 = vpow.pop %v1321
    %v1323 = vmul.f32 %v1320, 1.442695
    %v1324 = vpow.pop %v1323
    %v1325 = vadd.f32 %v1322, 1.0
    %v1326 = vadd.f32 %v1324, 1.0
    %v1327 = vrcp.pop %v1325
    %v1328 = vmul.f32 1.0, %v1327
    %v1329 = vrcp.pop %v1326
    %v1330 = vmul.f32 1.0, %v1329
    %v1331 = vtanh.pop %v1298
    %v1332 = vtanh.pop %v1300
    %v1335 = vrot.slane %v1298, 4
    %v1336 = vrot.slane %v1300, 4
    %v1339 = vxor.u32 %v1335, 2147483648
    %v1340 = vxor.u32 %v1336, 2147483648
    %v1341 = vmul.f32 %v1339, 1.442695
    %v1342 = vpow.pop %v1341
    %v1343 = vmul.f32 %v1340, 1.442695
    %v1344 = vpow.pop %v1343
    %v1345 = vadd.f32 %v1342, 1.0
    %v1346 = vadd.f32 %v1344, 1.0
    %v1347 = vrcp.pop %v1345
    %v1348 = vmul.f32 1.0, %v1347
    %v1349 = vrcp.pop %v1346
    %v1350 = vmul.f32 1.0, %v1349
    %v1351 = vmul.f32 %v1328, 0.0
    %v1352 = vmul.f32 %v1330, 0.0
    %v1353 = vmul.f32 %v1310, %v1331
    %v1354 = vmul.f32 %v1312, %v1332
    %v1355 = vadd.f32 %v1351, %v1353
    %v1356 = vadd.f32 %v1352, %v1354
    %v1357 = vtanh.pop %v1355
    %v1358 = vtanh.pop %v1356
    %v1359 = vmul.f32 %v1348, %v1357
    %v1360 = vmul.f32 %v1350, %v1358
    %v1363 = vlaneseq
    %v1364 = vshrl.u32 %v1363, 7
    %v1365 = vsub.s32 0, %v1364
    %v1366 = vrot.slane %v1359, %v1365
    %v1367 = vlaneseq
    %v1368 = vshrl.u32 %v1367, 7
    %v1369 = vsub.s32 0, %v1368
    %v1370 = vrot.slane %v1360, %v1369
    %v1371 = vsel %vm405, %v1370, %v1366
    %1373 = vmatprep.subr.mxu0 %v1140
    %1374 = vmatpush1.msra.mxu0 %v1139
    %1375 = vmatprep.subr.mxu0 %v1136
    %1376 = vmatpush1.msra.mxu0 %v1135
    %1377 = vmatprep.subr.mxu0 %v1132
    %1378 = vmatpush1.msra.mxu0 %v1131
    %1379 = vmatprep.subr.mxu0 %v1128
    %1380 = vmatpush1.msra.mxu0 %v1127
    %1381 = vmatprep.subr.mxu0 %v1124
    %1382 = vmatpush1.msra.mxu0 %v1123
    %1383 = vmatprep.subr.mxu0 %v1120
    %1384 = vmatpush1.msra.mxu0 %v1119
    %1385 = vmatprep.subr.mxu0 %v1116
    %1386 = vmatpush1.msra.mxu0 %v1115
    %1387 = vmatprep.subr.mxu0 %v1112
    %1388 = vmatpush1.msra.mxu0 %v1111
    %1389 = vmatprep.subr.mxu0 %v1108
    %1390 = vmatpush1.msra.mxu0 %v1107
    %1391 = vmatprep.subr.mxu0 %v1104
    %1392 = vmatpush1.msra.mxu0 %v1103
    %1393 = vmatprep.subr.mxu0 %v1100
    %1394 = vmatpush1.msra.mxu0 %v1099
    %1395 = vmatprep.subr.mxu0 %v1096
    %1396 = vmatpush1.msra.mxu0 %v1095
    %1397 = vmatprep.subr.mxu0 %v1092
    %1398 = vmatpush1.msra.mxu0 %v1091
    %1399 = vmatprep.subr.mxu0 %v1088
    %1400 = vmatpush1.msra.mxu0 %v1087
    %1401 = vmatprep.subr.mxu0 %v1084
    %1402 = vmatpush1.msra.mxu0 %v1083
    %1403 = vmatprep.subr.mxu0 %v1080
    %1404 = vmatpush1.msra.mxu0 %v1079
    %1405 = vmatprep.subr.mxu0 0.0
    %1406 = vmatpush2.msra.mxu0 0.0
    %1407 = vmatprep.subr.mxu0 0.0
    %1408 = vmatpush2.msra.mxu0 0.0
    %1409 = vmatprep.subr.mxu0 0.0
    %1410 = vmatpush2.msra.mxu0 0.0
    %1411 = vmatprep.subr.mxu0 0.0
    %1412 = vmatpush2.msra.mxu0 0.0
    %1413 = vmatprep.subr.mxu0 0.0
    %1414 = vmatpush2.msra.mxu0 0.0
    %1415 = vmatprep.subr.mxu0 0.0
    %1416 = vmatpush2.msra.mxu0 0.0
    %1417 = vmatprep.subr.mxu0 0.0
    %1418 = vmatpush2.msra.mxu0 0.0
    %1419 = vmatprep.subr.mxu0 0.0
    %1420 = vmatpush2.msra.mxu0 0.0
    %1421 = vmatprep.subr.mxu0 0.0
    %1422 = vmatpush2.msra.mxu0 0.0
    %1423 = vmatprep.subr.mxu0 0.0
    %1424 = vmatpush2.msra.mxu0 0.0
    %1425 = vmatprep.subr.mxu0 0.0
    %1426 = vmatpush2.msra.mxu0 0.0
    %1427 = vmatprep.subr.mxu0 0.0
    %1428 = vmatpush2.msra.mxu0 0.0
    %1429 = vmatprep.subr.mxu0 0.0
    %1430 = vmatpush2.msra.mxu0 0.0
    %1431 = vmatprep.subr.mxu0 0.0
    %1432 = vmatpush2.msra.mxu0 0.0
    %1433 = vmatprep.subr.mxu0 0.0
    %1434 = vmatpush2.msra.mxu0 0.0
    %1435 = vmatprep.subr.mxu0 0.0
    %1436 = vmatpush2.msra.mxu0 0.0
    %1437 = vmatprep.mubr.f32.mxu0 0.0
    %1438 = vmatmul.mubr.f32.gmra.mxu0 %v1371
    %v1439 = vpop.f32.mrf.mxu0
    %v1440 = vadd.f32 0.0, %v1439
    %v1441 = vpop.f32.mrf.mxu0
    %v1442 = vadd.f32 0.0, %v1441
    %1443 = vdwg.mxu0
    %1444 = vmatprep.subr.mxu0 %v1142
    %1445 = vmatpush1.msra.mxu0 %v1141
    %1446 = vmatprep.subr.mxu0 %v1138
    %1447 = vmatpush1.msra.mxu0 %v1137
    %1448 = vmatprep.subr.mxu0 %v1134
    %1449 = vmatpush1.msra.mxu0 %v1133
    %1450 = vmatprep.subr.mxu0 %v1130
    %1451 = vmatpush1.msra.mxu0 %v1129
    %1452 = vmatprep.subr.mxu0 %v1126
    %1453 = vmatpush1.msra.mxu0 %v1125
    %1454 = vmatprep.subr.mxu0 %v1122
    %1455 = vmatpush1.msra.mxu0 %v1121
    %1456 = vmatprep.subr.mxu0 %v1118
    %1457 = vmatpush1.msra.mxu0 %v1117
    %1458 = vmatprep.subr.mxu0 %v1114
    %1459 = vmatpush1.msra.mxu0 %v1113
    %1460 = vmatprep.subr.mxu0 %v1110
    %1461 = vmatpush1.msra.mxu0 %v1109
    %1462 = vmatprep.subr.mxu0 %v1106
    %1463 = vmatpush1.msra.mxu0 %v1105
    %1464 = vmatprep.subr.mxu0 %v1102
    %1465 = vmatpush1.msra.mxu0 %v1101
    %1466 = vmatprep.subr.mxu0 %v1098
    %1467 = vmatpush1.msra.mxu0 %v1097
    %1468 = vmatprep.subr.mxu0 %v1094
    %1469 = vmatpush1.msra.mxu0 %v1093
    %1470 = vmatprep.subr.mxu0 %v1090
    %1471 = vmatpush1.msra.mxu0 %v1089
    %1472 = vmatprep.subr.mxu0 %v1086
    %1473 = vmatpush1.msra.mxu0 %v1085
    %1474 = vmatprep.subr.mxu0 %v1082
    %1475 = vmatpush1.msra.mxu0 %v1081
    %1476 = vmatprep.subr.mxu0 0.0
    %1477 = vmatpush2.msra.mxu0 0.0
    %1478 = vmatprep.subr.mxu0 0.0
    %1479 = vmatpush2.msra.mxu0 0.0
    %1480 = vmatprep.subr.mxu0 0.0
    %1481 = vmatpush2.msra.mxu0 0.0
    %1482 = vmatprep.subr.mxu0 0.0
    %1483 = vmatpush2.msra.mxu0 0.0
    %1484 = vmatprep.subr.mxu0 0.0
    %1485 = vmatpush2.msra.mxu0 0.0
    %1486 = vmatprep.subr.mxu0 0.0
    %1487 = vmatpush2.msra.mxu0 0.0
    %1488 = vmatprep.subr.mxu0 0.0
    %1489 = vmatpush2.msra.mxu0 0.0
    %1490 = vmatprep.subr.mxu0 0.0
    %1491 = vmatpush2.msra.mxu0 0.0
    %1492 = vmatprep.subr.mxu0 0.0
    %1493 = vmatpush2.msra.mxu0 0.0
    %1494 = vmatprep.subr.mxu0 0.0
    %1495 = vmatpush2.msra.mxu0 0.0
    %1496 = vmatprep.subr.mxu0 0.0
    %1497 = vmatpush2.msra.mxu0 0.0
    %1498 = vmatprep.subr.mxu0 0.0
    %1499 = vmatpush2.msra.mxu0 0.0
    %1500 = vmatprep.subr.mxu0 0.0
    %1501 = vmatpush2.msra.mxu0 0.0
    %1502 = vmatprep.subr.mxu0 0.0
    %1503 = vmatpush2.msra.mxu0 0.0
    %1504 = vmatprep.subr.mxu0 0.0
    %1505 = vmatpush2.msra.mxu0 0.0
    %1506 = vmatprep.subr.mxu0 0.0
    %1507 = vmatpush2.msra.mxu0 0.0
    %1508 = vmatprep.mubr.f32.mxu0 0.0
    %1509 = vmatmul.mubr.f32.gmra.mxu0 %v1371
    %v1510 = vpop.f32.mrf.mxu0
    %v1511 = vadd.f32 0.0, %v1510
    %v1512 = vpop.f32.mrf.mxu0
    %v1513 = vadd.f32 0.0, %v1512
    %1514 = vdwg.mxu0
    %v1519 = vcombine.low %v1440, %v1442
    %v1520 = vcombine.low %v1511, %v1513
    %v1521 = vrot.slane %v1519, 7
    %v1522 = vrot.slane %v1520, 7
    %v1527 = vadd.f32 %v1071, %v1521
    %v1528 = vadd.f32 %v1073, %v1522
    %v1529 = vadd.f32 %v1072, %v1519
    %v1530 = vadd.f32 %v1074, %v1520
    %v1531 = vxor.u32 %v1527, 2147483648
    %v1532 = vxor.u32 %v1529, 2147483648
    %v1533 = vmul.f32 %v1531, 1.442695
    %v1534 = vpow.pop %v1533
    %v1535 = vmul.f32 %v1532, 1.442695
    %v1536 = vpow.pop %v1535
    %v1537 = vadd.f32 %v1534, 1.0
    %v1538 = vadd.f32 %v1536, 1.0
    %v1539 = vrcp.pop %v1537
    %v1540 = vmul.f32 1.0, %v1539
    %v1541 = vrcp.pop %v1538
    %v1542 = vmul.f32 1.0, %v1541
    %v1545 = vrot.slane %v1527, 4
    %v1546 = vrot.slane %v1529, 4
    %v1549 = vxor.u32 %v1545, 2147483648
    %v1550 = vxor.u32 %v1546, 2147483648
    %v1551 = vmul.f32 %v1549, 1.442695
    %v1552 = vpow.pop %v1551
    %v1553 = vmul.f32 %v1550, 1.442695
    %v1554 = vpow.pop %v1553
    %v1555 = vadd.f32 %v1552, 1.0
    %v1556 = vadd.f32 %v1554, 1.0
    %v1557 = vrcp.pop %v1555
    %v1558 = vmul.f32 1.0, %v1557
    %v1559 = vrcp.pop %v1556
    %v1560 = vmul.f32 1.0, %v1559
    %v1561 = vtanh.pop %v1528
    %v1562 = vtanh.pop %v1530
    %v1565 = vrot.slane %v1528, 4
    %v1566 = vrot.slane %v1530, 4
    %v1569 = vxor.u32 %v1565, 2147483648
    %v1570 = vxor.u32 %v1566, 2147483648
    %v1571 = vmul.f32 %v1569, 1.442695
    %v1572 = vpow.pop %v1571
    %v1573 = vmul.f32 %v1570, 1.442695
    %v1574 = vpow.pop %v1573
    %v1575 = vadd.f32 %v1572, 1.0
    %v1576 = vadd.f32 %v1574, 1.0
    %v1577 = vrcp.pop %v1575
    %v1578 = vmul.f32 1.0, %v1577
    %v1579 = vrcp.pop %v1576
    %v1580 = vmul.f32 1.0, %v1579
    %v1583 = vrot.slane %v1355, 7
    %v1584 = vrot.slane %v1356, 7
    %v1587 = vmul.f32 %v1558, %v1583
    %v1588 = vmul.f32 %v1560, %v1584
    %v1589 = vmul.f32 %v1540, %v1561
    %v1590 = vmul.f32 %v1542, %v1562
    %v1591 = vadd.f32 %v1587, %v1589
    %v1592 = vadd.f32 %v1588, %v1590
    %v1593 = vtanh.pop %v1591
    %v1594 = vtanh.pop %v1592
    %v1595 = vmul.f32 %v1578, %v1593
    %v1596 = vmul.f32 %v1580, %v1594
    %v1599 = vlaneseq
    %v1600 = vshrl.u32 %v1599, 7
    %v1601 = vsub.s32 1, %v1600
    %v1602 = vrot.slane %v1595, %v1601
    %v1603 = vlaneseq
    %v1604 = vshrl.u32 %v1603, 7
    %v1605 = vsub.s32 1, %v1604
    %v1606 = vrot.slane %v1596, %v1605
    %v1607 = vsel %vm405, %v1606, %v1602
    %1609 = vmatprep.subr.mxu0 %v1140
    %1610 = vmatpush1.msra.mxu0 %v1139
    %1611 = vmatprep.subr.mxu0 %v1136
    %1612 = vmatpush1.msra.mxu0 %v1135
    %1613 = vmatprep.subr.mxu0 %v1132
    %1614 = vmatpush1.msra.mxu0 %v1131
    %1615 = vmatprep.subr.mxu0 %v1128
    %1616 = vmatpush1.msra.mxu0 %v1127
    %1617 = vmatprep.subr.mxu0 %v1124
    %1618 = vmatpush1.msra.mxu0 %v1123
    %1619 = vmatprep.subr.mxu0 %v1120
    %1620 = vmatpush1.msra.mxu0 %v1119
    %1621 = vmatprep.subr.mxu0 %v1116
    %1622 = vmatpush1.msra.mxu0 %v1115
    %1623 = vmatprep.subr.mxu0 %v1112
    %1624 = vmatpush1.msra.mxu0 %v1111
    %1625 = vmatprep.subr.mxu0 %v1108
    %1626 = vmatpush1.msra.mxu0 %v1107
    %1627 = vmatprep.subr.mxu0 %v1104
    %1628 = vmatpush1.msra.mxu0 %v1103
    %1629 = vmatprep.subr.mxu0 %v1100
    %1630 = vmatpush1.msra.mxu0 %v1099
    %1631 = vmatprep.subr.mxu0 %v1096
    %1632 = vmatpush1.msra.mxu0 %v1095
    %1633 = vmatprep.subr.mxu0 %v1092
    %1634 = vmatpush1.msra.mxu0 %v1091
    %1635 = vmatprep.subr.mxu0 %v1088
    %1636 = vmatpush1.msra.mxu0 %v1087
    %1637 = vmatprep.subr.mxu0 %v1084
    %1638 = vmatpush1.msra.mxu0 %v1083
    %1639 = vmatprep.subr.mxu0 %v1080
    %1640 = vmatpush1.msra.mxu0 %v1079
    %1641 = vmatprep.subr.mxu0 0.0
    %1642 = vmatpush2.msra.mxu0 0.0
    %1643 = vmatprep.subr.mxu0 0.0
    %1644 = vmatpush2.msra.mxu0 0.0
    %1645 = vmatprep.subr.mxu0 0.0
    %1646 = vmatpush2.msra.mxu0 0.0
    %1647 = vmatprep.subr.mxu0 0.0
    %1648 = vmatpush2.msra.mxu0 0.0
    %1649 = vmatprep.subr.mxu0 0.0
    %1650 = vmatpush2.msra.mxu0 0.0
    %1651 = vmatprep.subr.mxu0 0.0
    %1652 = vmatpush2.msra.mxu0 0.0
    %1653 = vmatprep.subr.mxu0 0.0
    %1654 = vmatpush2.msra.mxu0 0.0
    %1655 = vmatprep.subr.mxu0 0.0
    %1656 = vmatpush2.msra.mxu0 0.0
    %1657 = vmatprep.subr.mxu0 0.0
    %1658 = vmatpush2.msra.mxu0 0.0
    %1659 = vmatprep.subr.mxu0 0.0
    %1660 = vmatpush2.msra.mxu0 0.0
    %1661 = vmatprep.subr.mxu0 0.0
    %1662 = vmatpush2.msra.mxu0 0.0
    %1663 = vmatprep.subr.mxu0 0.0
    %1664 = vmatpush2.msra.mxu0 0.0
    %1665 = vmatprep.subr.mxu0 0.0
    %1666 = vmatpush2.msra.mxu0 0.0
    %1667 = vmatprep.subr.mxu0 0.0
    %1668 = vmatpush2.msra.mxu0 0.0
    %1669 = vmatprep.subr.mxu0 0.0
    %1670 = vmatpush2.msra.mxu0 0.0
    %1671 = vmatprep.subr.mxu0 0.0
    %1672 = vmatpush2.msra.mxu0 0.0
    %1673 = vmatprep.mubr.f32.mxu0 0.0
    %1674 = vmatmul.mubr.f32.gmra.mxu0 %v1607
    %v1675 = vpop.f32.mrf.mxu0
    %v1676 = vadd.f32 0.0, %v1675
    %v1677 = vpop.f32.mrf.mxu0
    %v1678 = vadd.f32 0.0, %v1677
    %1679 = vdwg.mxu0
    %1680 = vmatprep.subr.mxu0 %v1142
    %1681 = vmatpush1.msra.mxu0 %v1141
    %1682 = vmatprep.subr.mxu0 %v1138
    %1683 = vmatpush1.msra.mxu0 %v1137
    %1684 = vmatprep.subr.mxu0 %v1134
    %1685 = vmatpush1.msra.mxu0 %v1133
    %1686 = vmatprep.subr.mxu0 %v1130
    %1687 = vmatpush1.msra.mxu0 %v1129
    %1688 = vmatprep.subr.mxu0 %v1126
    %1689 = vmatpush1.msra.mxu0 %v1125
    %1690 = vmatprep.subr.mxu0 %v1122
    %1691 = vmatpush1.msra.mxu0 %v1121
    %1692 = vmatprep.subr.mxu0 %v1118
    %1693 = vmatpush1.msra.mxu0 %v1117
    %1694 = vmatprep.subr.mxu0 %v1114
    %1695 = vmatpush1.msra.mxu0 %v1113
    %1696 = vmatprep.subr.mxu0 %v1110
    %1697 = vmatpush1.msra.mxu0 %v1109
    %1698 = vmatprep.subr.mxu0 %v1106
    %1699 = vmatpush1.msra.mxu0 %v1105
    %1700 = vmatprep.subr.mxu0 %v1102
    %1701 = vmatpush1.msra.mxu0 %v1101
    %1702 = vmatprep.subr.mxu0 %v1098
    %1703 = vmatpush1.msra.mxu0 %v1097
    %1704 = vmatprep.subr.mxu0 %v1094
    %1705 = vmatpush1.msra.mxu0 %v1093
    %1706 = vmatprep.subr.mxu0 %v1090
    %1707 = vmatpush1.msra.mxu0 %v1089
    %1708 = vmatprep.subr.mxu0 %v1086
    %1709 = vmatpush1.msra.mxu0 %v1085
    %1710 = vmatprep.subr.mxu0 %v1082
    %1711 = vmatpush1.msra.mxu0 %v1081
    %1712 = vmatprep.subr.mxu0 0.0
    %1713 = vmatpush2.msra.mxu0 0.0
    %1714 = vmatprep.subr.mxu0 0.0
    %1715 = vmatpush2.msra.mxu0 0.0
    %1716 = vmatprep.subr.mxu0 0.0
    %1717 = vmatpush2.msra.mxu0 0.0
    %1718 = vmatprep.subr.mxu0 0.0
    %1719 = vmatpush2.msra.mxu0 0.0
    %1720 = vmatprep.subr.mxu0 0.0
    %1721 = vmatpush2.msra.mxu0 0.0
    %1722 = vmatprep.subr.mxu0 0.0
    %1723 = vmatpush2.msra.mxu0 0.0
    %1724 = vmatprep.subr.mxu0 0.0
    %1725 = vmatpush2.msra.mxu0 0.0
    %1726 = vmatprep.subr.mxu0 0.0
    %1727 = vmatpush2.msra.mxu0 0.0
    %1728 = vmatprep.subr.mxu0 0.0
    %1729 = vmatpush2.msra.mxu0 0.0
    %1730 = vmatprep.subr.mxu0 0.0
    %1731 = vmatpush2.msra.mxu0 0.0
    %1732 = vmatprep.subr.mxu0 0.0
    %1733 = vmatpush2.msra.mxu0 0.0
    %1734 = vmatprep.subr.mxu0 0.0
    %1735 = vmatpush2.msra.mxu0 0.0
    %1736 = vmatprep.subr.mxu0 0.0
    %1737 = vmatpush2.msra.mxu0 0.0
    %1738 = vmatprep.subr.mxu0 0.0
    %1739 = vmatpush2.msra.mxu0 0.0
    %1740 = vmatprep.subr.mxu0 0.0
    %1741 = vmatpush2.msra.mxu0 0.0
    %1742 = vmatprep.subr.mxu0 0.0
    %1743 = vmatpush2.msra.mxu0 0.0
    %1744 = vmatprep.mubr.f32.mxu0 0.0
    %1745 = vmatmul.mubr.f32.gmra.mxu0 %v1607
    %v1746 = vpop.f32.mrf.mxu0
    %v1747 = vadd.f32 0.0, %v1746
    %v1748 = vpop.f32.mrf.mxu0
    %v1749 = vadd.f32 0.0, %v1748
    %1750 = vdwg.mxu0
    %v1755 = vcombine.low %v1676, %v1678
    %v1756 = vcombine.low %v1747, %v1749
    %v1757 = vrot.slane %v1755, 6
    %v1758 = vrot.slane %v1756, 6
    %v1759 = vrot.slane %v1755, 7
    %v1760 = vrot.slane %v1756, 7
    %v1765 = vadd.f32 %v1071, %v1757
    %v1766 = vadd.f32 %v1073, %v1758
    %v1767 = vadd.f32 %v1072, %v1759
    %v1768 = vadd.f32 %v1074, %v1760
    %v1769 = vxor.u32 %v1765, 2147483648
    %v1770 = vxor.u32 %v1767, 2147483648
    %v1771 = vmul.f32 %v1769, 1.442695
    %v1772 = vpow.pop %v1771
    %v1773 = vmul.f32 %v1770, 1.442695
    %v1774 = vpow.pop %v1773
    %v1775 = vadd.f32 %v1772, 1.0
    %v1776 = vadd.f32 %v1774, 1.0
    %v1777 = vrcp.pop %v1775
    %v1778 = vmul.f32 1.0, %v1777
    %v1779 = vrcp.pop %v1776
    %v1780 = vmul.f32 1.0, %v1779
    %v1783 = vrot.slane %v1765, 4
    %v1784 = vrot.slane %v1767, 4
    %v1787 = vxor.u32 %v1783, 2147483648
    %v1788 = vxor.u32 %v1784, 2147483648
    %v1789 = vmul.f32 %v1787, 1.442695
    %v1790 = vpow.pop %v1789
    %v1791 = vmul.f32 %v1788, 1.442695
    %v1792 = vpow.pop %v1791
    %v1793 = vadd.f32 %v1790, 1.0
    %v1794 = vadd.f32 %v1792, 1.0
    %v1795 = vrcp.pop %v1793
    %v1796 = vmul.f32 1.0, %v1795
    %v1797 = vrcp.pop %v1794
    %v1798 = vmul.f32 1.0, %v1797
    %v1799 = vtanh.pop %v1766
    %v1800 = vtanh.pop %v1768
    %v1803 = vrot.slane %v1766, 4
    %v1804 = vrot.slane %v1768, 4
    %v1807 = vxor.u32 %v1803, 2147483648
    %v1808 = vxor.u32 %v1804, 2147483648
    %v1809 = vmul.f32 %v1807, 1.442695
    %v1810 = vpow.pop %v1809
    %v1811 = vmul.f32 %v1808, 1.442695
    %v1812 = vpow.pop %v1811
    %v1813 = vadd.f32 %v1810, 1.0
    %v1814 = vadd.f32 %v1812, 1.0
    %v1815 = vrcp.pop %v1813
    %v1816 = vmul.f32 1.0, %v1815
    %v1817 = vrcp.pop %v1814
    %v1818 = vmul.f32 1.0, %v1817
    %v1821 = vrot.slane %v1591, 7
    %v1822 = vrot.slane %v1592, 7
    %v1825 = vmul.f32 %v1796, %v1821
    %v1826 = vmul.f32 %v1798, %v1822
    %v1827 = vmul.f32 %v1778, %v1799
    %v1828 = vmul.f32 %v1780, %v1800
    %v1829 = vadd.f32 %v1825, %v1827
    %v1830 = vadd.f32 %v1826, %v1828
    %v1831 = vtanh.pop %v1829
    %v1832 = vtanh.pop %v1830
    %v1833 = vmul.f32 %v1816, %v1831
    %v1834 = vmul.f32 %v1818, %v1832
    %v1837 = vlaneseq
    %v1838 = vshrl.u32 %v1837, 7
    %v1839 = vsub.s32 2, %v1838
    %v1840 = vrot.slane %v1833, %v1839
    %v1841 = vlaneseq
    %v1842 = vshrl.u32 %v1841, 7
    %v1843 = vsub.s32 2, %v1842
    %v1844 = vrot.slane %v1834, %v1843
    %v1845 = vsel %vm405, %v1844, %v1840
    %1847 = vmatprep.subr.mxu0 %v1140
    %1848 = vmatpush1.msra.mxu0 %v1139
    %1849 = vmatprep.subr.mxu0 %v1136
    %1850 = vmatpush1.msra.mxu0 %v1135
    %1851 = vmatprep.subr.mxu0 %v1132
    %1852 = vmatpush1.msra.mxu0 %v1131
    %1853 = vmatprep.subr.mxu0 %v1128
    %1854 = vmatpush1.msra.mxu0 %v1127
    %1855 = vmatprep.subr.mxu0 %v1124
    %1856 = vmatpush1.msra.mxu0 %v1123
    %1857 = vmatprep.subr.mxu0 %v1120
    %1858 = vmatpush1.msra.mxu0 %v1119
    %1859 = vmatprep.subr.mxu0 %v1116
    %1860 = vmatpush1.msra.mxu0 %v1115
    %1861 = vmatprep.subr.mxu0 %v1112
    %1862 = vmatpush1.msra.mxu0 %v1111
    %1863 = vmatprep.subr.mxu0 %v1108
    %1864 = vmatpush1.msra.mxu0 %v1107
    %1865 = vmatprep.subr.mxu0 %v1104
    %1866 = vmatpush1.msra.mxu0 %v1103
    %1867 = vmatprep.subr.mxu0 %v1100
    %1868 = vmatpush1.msra.mxu0 %v1099
    %1869 = vmatprep.subr.mxu0 %v1096
    %1870 = vmatpush1.msra.mxu0 %v1095
    %1871 = vmatprep.subr.mxu0 %v1092
    %1872 = vmatpush1.msra.mxu0 %v1091
    %1873 = vmatprep.subr.mxu0 %v1088
    %1874 = vmatpush1.msra.mxu0 %v1087
    %1875 = vmatprep.subr.mxu0 %v1084
    %1876 = vmatpush1.msra.mxu0 %v1083
    %1877 = vmatprep.subr.mxu0 %v1080
    %1878 = vmatpush1.msra.mxu0 %v1079
    %1879 = vmatprep.subr.mxu0 0.0
    %1880 = vmatpush2.msra.mxu0 0.0
    %1881 = vmatprep.subr.mxu0 0.0
    %1882 = vmatpush2.msra.mxu0 0.0
    %1883 = vmatprep.subr.mxu0 0.0
    %1884 = vmatpush2.msra.mxu0 0.0
    %1885 = vmatprep.subr.mxu0 0.0
    %1886 = vmatpush2.msra.mxu0 0.0
    %1887 = vmatprep.subr.mxu0 0.0
    %1888 = vmatpush2.msra.mxu0 0.0
    %1889 = vmatprep.subr.mxu0 0.0
    %1890 = vmatpush2.msra.mxu0 0.0
    %1891 = vmatprep.subr.mxu0 0.0
    %1892 = vmatpush2.msra.mxu0 0.0
    %1893 = vmatprep.subr.mxu0 0.0
    %1894 = vmatpush2.msra.mxu0 0.0
    %1895 = vmatprep.subr.mxu0 0.0
    %1896 = vmatpush2.msra.mxu0 0.0
    %1897 = vmatprep.subr.mxu0 0.0
    %1898 = vmatpush2.msra.mxu0 0.0
    %1899 = vmatprep.subr.mxu0 0.0
    %1900 = vmatpush2.msra.mxu0 0.0
    %1901 = vmatprep.subr.mxu0 0.0
    %1902 = vmatpush2.msra.mxu0 0.0
    %1903 = vmatprep.subr.mxu0 0.0
    %1904 = vmatpush2.msra.mxu0 0.0
    %1905 = vmatprep.subr.mxu0 0.0
    %1906 = vmatpush2.msra.mxu0 0.0
    %1907 = vmatprep.subr.mxu0 0.0
    %1908 = vmatpush2.msra.mxu0 0.0
    %1909 = vmatprep.subr.mxu0 0.0
    %1910 = vmatpush2.msra.mxu0 0.0
    %1911 = vmatprep.mubr.f32.mxu0 0.0
    %1912 = vmatmul.mubr.f32.gmra.mxu0 %v1845
    %v1913 = vpop.f32.mrf.mxu0
    %v1914 = vadd.f32 0.0, %v1913
    %v1915 = vpop.f32.mrf.mxu0
    %v1916 = vadd.f32 0.0, %v1915
    %1917 = vdwg.mxu0
    %1918 = vmatprep.subr.mxu0 %v1142
    %1919 = vmatpush1.msra.mxu0 %v1141
    %1920 = vmatprep.subr.mxu0 %v1138
    %1921 = vmatpush1.msra.mxu0 %v1137
    %1922 = vmatprep.subr.mxu0 %v1134
    %1923 = vmatpush1.msra.mxu0 %v1133
    %1924 = vmatprep.subr.mxu0 %v1130
    %1925 = vmatpush1.msra.mxu0 %v1129
    %1926 = vmatprep.subr.mxu0 %v1126
    %1927 = vmatpush1.msra.mxu0 %v1125
    %1928 = vmatprep.subr.mxu0 %v1122
    %1929 = vmatpush1.msra.mxu0 %v1121
    %1930 = vmatprep.subr.mxu0 %v1118
    %1931 = vmatpush1.msra.mxu0 %v1117
    %1932 = vmatprep.subr.mxu0 %v1114
    %1933 = vmatpush1.msra.mxu0 %v1113
    %1934 = vmatprep.subr.mxu0 %v1110
    %1935 = vmatpush1.msra.mxu0 %v1109
    %1936 = vmatprep.subr.mxu0 %v1106
    %1937 = vmatpush1.msra.mxu0 %v1105
    %1938 = vmatprep.subr.mxu0 %v1102
    %1939 = vmatpush1.msra.mxu0 %v1101
    %1940 = vmatprep.subr.mxu0 %v1098
    %1941 = vmatpush1.msra.mxu0 %v1097
    %1942 = vmatprep.subr.mxu0 %v1094
    %1943 = vmatpush1.msra.mxu0 %v1093
    %1944 = vmatprep.subr.mxu0 %v1090
    %1945 = vmatpush1.msra.mxu0 %v1089
    %1946 = vmatprep.subr.mxu0 %v1086
    %1947 = vmatpush1.msra.mxu0 %v1085
    %1948 = vmatprep.subr.mxu0 %v1082
    %1949 = vmatpush1.msra.mxu0 %v1081
    %1950 = vmatprep.subr.mxu0 0.0
    %1951 = vmatpush2.msra.mxu0 0.0
    %1952 = vmatprep.subr.mxu0 0.0
    %1953 = vmatpush2.msra.mxu0 0.0
    %1954 = vmatprep.subr.mxu0 0.0
    %1955 = vmatpush2.msra.mxu0 0.0
    %1956 = vmatprep.subr.mxu0 0.0
    %1957 = vmatpush2.msra.mxu0 0.0
    %1958 = vmatprep.subr.mxu0 0.0
    %1959 = vmatpush2.msra.mxu0 0.0
    %1960 = vmatprep.subr.mxu0 0.0
    %1961 = vmatpush2.msra.mxu0 0.0
    %1962 = vmatprep.subr.mxu0 0.0
    %1963 = vmatpush2.msra.mxu0 0.0
    %1964 = vmatprep.subr.mxu0 0.0
    %1965 = vmatpush2.msra.mxu0 0.0
    %1966 = vmatprep.subr.mxu0 0.0
    %1967 = vmatpush2.msra.mxu0 0.0
    %1968 = vmatprep.subr.mxu0 0.0
    %1969 = vmatpush2.msra.mxu0 0.0
    %1970 = vmatprep.subr.mxu0 0.0
    %1971 = vmatpush2.msra.mxu0 0.0
    %1972 = vmatprep.subr.mxu0 0.0
    %1973 = vmatpush2.msra.mxu0 0.0
    %1974 = vmatprep.subr.mxu0 0.0
    %1975 = vmatpush2.msra.mxu0 0.0
    %1976 = vmatprep.subr.mxu0 0.0
    %1977 = vmatpush2.msra.mxu0 0.0
    %1978 = vmatprep.subr.mxu0 0.0
    %1979 = vmatpush2.msra.mxu0 0.0
    %1980 = vmatprep.subr.mxu0 0.0
    %1981 = vmatpush2.msra.mxu0 0.0
    %1982 = vmatprep.mubr.f32.mxu0 0.0
    %1983 = vmatmul.mubr.f32.gmra.mxu0 %v1845
    %v1984 = vpop.f32.mrf.mxu0
    %v1985 = vadd.f32 0.0, %v1984
    %v1986 = vpop.f32.mrf.mxu0
    %v1987 = vadd.f32 0.0, %v1986
    %1988 = vdwg.mxu0
    %v1993 = vcombine.low %v1914, %v1916
    %v1994 = vcombine.low %v1985, %v1987
    %v1995 = vrot.slane %v1993, 5
    %v1996 = vrot.slane %v1994, 5
    %v1997 = vrot.slane %v1993, 6
    %v1998 = vrot.slane %v1994, 6
    %v2003 = vadd.f32 %v1071, %v1995
    %v2004 = vadd.f32 %v1073, %v1996
    %v2005 = vadd.f32 %v1072, %v1997
    %v2006 = vadd.f32 %v1074, %v1998
    %v2007 = vxor.u32 %v2003, 2147483648
    %v2008 = vxor.u32 %v2005, 2147483648
    %v2009 = vmul.f32 %v2007, 1.442695
    %v2010 = vpow.pop %v2009
    %v2011 = vmul.f32 %v2008, 1.442695
    %v2012 = vpow.pop %v2011
    %v2013 = vadd.f32 %v2010, 1.0
    %v2014 = vadd.f32 %v2012, 1.0
    %v2015 = vrcp.pop %v2013
    %v2016 = vmul.f32 1.0, %v2015
    %v2017 = vrcp.pop %v2014
    %v2018 = vmul.f32 1.0, %v2017
    %v2021 = vrot.slane %v2003, 4
    %v2022 = vrot.slane %v2005, 4
    %v2025 = vxor.u32 %v2021, 2147483648
    %v2026 = vxor.u32 %v2022, 2147483648
    %v2027 = vmul.f32 %v2025, 1.442695
    %v2028 = vpow.pop %v2027
    %v2029 = vmul.f32 %v2026, 1.442695
    %v2030 = vpow.pop %v2029
    %v2031 = vadd.f32 %v2028, 1.0
    %v2032 = vadd.f32 %v2030, 1.0
    %v2033 = vrcp.pop %v2031
    %v2034 = vmul.f32 1.0, %v2033
    %v2035 = vrcp.pop %v2032
    %v2036 = vmul.f32 1.0, %v2035
    %v2037 = vtanh.pop %v2004
    %v2038 = vtanh.pop %v2006
    %v2041 = vrot.slane %v2004, 4
    %v2042 = vrot.slane %v2006, 4
    %v2045 = vxor.u32 %v2041, 2147483648
    %v2046 = vxor.u32 %v2042, 2147483648
    %v2047 = vmul.f32 %v2045, 1.442695
    %v2048 = vpow.pop %v2047
    %v2049 = vmul.f32 %v2046, 1.442695
    %v2050 = vpow.pop %v2049
    %v2051 = vadd.f32 %v2048, 1.0
    %v2052 = vadd.f32 %v2050, 1.0
    %v2053 = vrcp.pop %v2051
    %v2054 = vmul.f32 1.0, %v2053
    %v2055 = vrcp.pop %v2052
    %v2056 = vmul.f32 1.0, %v2055
    %v2059 = vrot.slane %v1829, 7
    %v2060 = vrot.slane %v1830, 7
    %v2063 = vmul.f32 %v2034, %v2059
    %v2064 = vmul.f32 %v2036, %v2060
    %v2065 = vmul.f32 %v2016, %v2037
    %v2066 = vmul.f32 %v2018, %v2038
    %v2067 = vadd.f32 %v2063, %v2065
    %v2068 = vadd.f32 %v2064, %v2066
    %v2069 = vtanh.pop %v2067
    %v2070 = vtanh.pop %v2068
    %v2071 = vmul.f32 %v2054, %v2069
    %v2072 = vmul.f32 %v2056, %v2070
    %v2073 = vld [vmem:[%s8] sm:$0xff]
    %v2074 = vld [vmem:[%s8 + $0x8] sm:$0xff]
    %v2075 = vld [vmem:[%s8 + $0x10] sm:$0xff]
    %v2076 = vld [vmem:[%s8 + $0x18] sm:$0xff]
    %v2077 = vld [vmem:[%s8 + $0x20] sm:$0xff]
    %v2078 = vld [vmem:[%s8 + $0x28] sm:$0xff]
    %v2079 = vld [vmem:[%s8 + $0x30] sm:$0xff]
    %v2080 = vld [vmem:[%s8 + $0x38] sm:$0xff]
    %v2081 = vld [vmem:[%s8 + $0x40] sm:$0xff]
    %v2082 = vld [vmem:[%s8 + $0x48] sm:$0xff]
    %v2083 = vld [vmem:[%s8 + $0x50] sm:$0xff]
    %v2084 = vld [vmem:[%s8 + $0x58] sm:$0xff]
    %v2085 = vld [vmem:[%s8 + $0x60] sm:$0xff]
    %v2086 = vld [vmem:[%s8 + $0x68] sm:$0xff]
    %v2087 = vld [vmem:[%s8 + $0x70] sm:$0xff]
    %v2088 = vld [vmem:[%s8 + $0x78] sm:$0xff]
    %v2089 = vld [vmem:[%s9] sm:$0x1]
    %v2091 = vlaneseq
    %v2092 = vshrl.u32 %v2091, 7
    %v2093 = vsub.s32 0, %v2092
    %v2094 = vrot.slane %v2089, %v2093
    %v2098 = vlaneseq
    %v2099 = vshrl.u32 %v2098, 7
    %v2100 = vsub.s32 3, %v2099
    %v2101 = vrot.slane %v2071, %v2100
    %v2102 = vlaneseq
    %v2103 = vshrl.u32 %v2102, 7
    %v2104 = vsub.s32 3, %v2103
    %v2105 = vrot.slane %v2072, %v2104
    %v2106 = vsel %vm405, %v2105, %v2101
    %2108 = vmatprep.subr.mxu0 0.0
    %2109 = vmatpush1.msra.mxu0 %v2088
    %2110 = vmatprep.subr.mxu0 0.0
    %2111 = vmatpush1.msra.mxu0 %v2087
    %2112 = vmatprep.subr.mxu0 0.0
    %2113 = vmatpush1.msra.mxu0 %v2086
    %2114 = vmatprep.subr.mxu0 0.0
    %2115 = vmatpush1.msra.mxu0 %v2085
    %2116 = vmatprep.subr.mxu0 0.0
    %2117 = vmatpush1.msra.mxu0 %v2084
    %2118 = vmatprep.subr.mxu0 0.0
    %2119 = vmatpush1.msra.mxu0 %v2083
    %2120 = vmatprep.subr.mxu0 0.0
    %2121 = vmatpush1.msra.mxu0 %v2082
    %2122 = vmatprep.subr.mxu0 0.0
    %2123 = vmatpush1.msra.mxu0 %v2081
    %2124 = vmatprep.subr.mxu0 0.0
    %2125 = vmatpush1.msra.mxu0 %v2080
    %2126 = vmatprep.subr.mxu0 0.0
    %2127 = vmatpush1.msra.mxu0 %v2079
    %2128 = vmatprep.subr.mxu0 0.0
    %2129 = vmatpush1.msra.mxu0 %v2078
    %2130 = vmatprep.subr.mxu0 0.0
    %2131 = vmatpush1.msra.mxu0 %v2077
    %2132 = vmatprep.subr.mxu0 0.0
    %2133 = vmatpush1.msra.mxu0 %v2076
    %2134 = vmatprep.subr.mxu0 0.0
    %2135 = vmatpush1.msra.mxu0 %v2075
    %2136 = vmatprep.subr.mxu0 0.0
    %2137 = vmatpush1.msra.mxu0 %v2074
    %2138 = vmatprep.subr.mxu0 0.0
    %2139 = vmatpush1.msra.mxu0 %v2073
    %2140 = vmatprep.subr.mxu0 0.0
    %2141 = vmatpush2.msra.mxu0 0.0
    %2142 = vmatprep.subr.mxu0 0.0
    %2143 = vmatpush2.msra.mxu0 0.0
    %2144 = vmatprep.subr.mxu0 0.0
    %2145 = vmatpush2.msra.mxu0 0.0
    %2146 = vmatprep.subr.mxu0 0.0
    %2147 = vmatpush2.msra.mxu0 0.0
    %2148 = vmatprep.subr.mxu0 0.0
    %2149 = vmatpush2.msra.mxu0 0.0
    %2150 = vmatprep.subr.mxu0 0.0
    %2151 = vmatpush2.msra.mxu0 0.0
    %2152 = vmatprep.subr.mxu0 0.0
    %2153 = vmatpush2.msra.mxu0 0.0
    %2154 = vmatprep.subr.mxu0 0.0
    %2155 = vmatpush2.msra.mxu0 0.0
    %2156 = vmatprep.subr.mxu0 0.0
    %2157 = vmatpush2.msra.mxu0 0.0
    %2158 = vmatprep.subr.mxu0 0.0
    %2159 = vmatpush2.msra.mxu0 0.0
    %2160 = vmatprep.subr.mxu0 0.0
    %2161 = vmatpush2.msra.mxu0 0.0
    %2162 = vmatprep.subr.mxu0 0.0
    %2163 = vmatpush2.msra.mxu0 0.0
    %2164 = vmatprep.subr.mxu0 0.0
    %2165 = vmatpush2.msra.mxu0 0.0
    %2166 = vmatprep.subr.mxu0 0.0
    %2167 = vmatpush2.msra.mxu0 0.0
    %2168 = vmatprep.subr.mxu0 0.0
    %2169 = vmatpush2.msra.mxu0 0.0
    %2170 = vmatprep.subr.mxu0 0.0
    %2171 = vmatpush2.msra.mxu0 0.0
    %2172 = vmatprep.mubr.f32.mxu0 0.0
    %2173 = vmatmul.mubr.f32.gmra.mxu0 %v2106
    %v2174 = vpop.f32.mrf.mxu0
    %v2175 = vadd.f32 %v2094, %v2174
    %v2176 = vpop.f32.mrf.mxu0
    %2177 = vdwg.mxu0
    %vm2178 = vcmask 17408
    %2179 = vst.msk [vmem:[#allocation8] sm:$0x3] %vm2178, %v2175
    // Predicated region
    $region50: #{cnn1d_lstm_forward.1} parent=1 // pred_check
      _
    $region51: #{cnn1d_lstm_forward.1} parent=1 // pred_check_branch
      %2181 = sbr.rel (0) target = $region53
    $region52: #{cnn1d_lstm_forward.1} parent=1 // pred_region
      %s2183 = ssub.s32 32, 32
      %2184 = vsyncadd [#allocation5], %s2183
      %s2186 = sshll.u32 [#allocation8], 4
      %s2187 = int_to_ptr.vmem [resolvable:$true] %s2186
      %2189 = dma.vmem_to_hbm [thread:$0]  %s2187, 32, %s10, [#allocation5]
    $region53: #{cnn1d_lstm_forward.1} parent=1 // pred_fallthru
      _
    // Predicated region
    $region54: #{cnn1d_lstm_forward.1} parent=1 // pred_check
      _
    $region55: #{cnn1d_lstm_forward.1} parent=1 // pred_check_branch
      %2191 = sbr.rel (0) target = $region57
    $region56: #{cnn1d_lstm_forward.1} parent=1 // pred_region
      %2192 = dma.done [#allocation5], 32
    $region57: #{cnn1d_lstm_forward.1} parent=1 // pred_fallthru
      _
    %2193 = vsyncpa [#allocation4], 1
    %2194 = vsyncpa [#allocation7], 1
    %2195 = vsyncpa [#allocation5], 1

</llo_original>
